<compile_context>
chip_gen: v5e
topology: v5e:2x2
jax: 0.10.0
libtpu: 0.0.40
codegen_flags: <defaults>
</compile_context>

<pallas_src>
import math
from functools import partial

import jax
import jax.numpy as jnp
from jax.experimental import pallas as pl
from jax.experimental.pallas import tpu as pltpu

ACT_DTYPE = jnp.float32          # residual stream / stats dtype
W_DTYPE = jnp.bfloat16           # MXU weight dtype (fp32 accumulation everywhere)
LN_EPS = 1e-5
ROW_TILE = 512                   # target rows per grid step for the (M, d) kernels
VMEM_LIMIT = 48 * 1024 * 1024    # safe on v7x (64 MiB/TC), generous on v5e/v6e

# bf16 EUP (sigmoid) only on v6e / v7x; v5e / v4 have no bf16 VPU/EUP -> keep fp32.
try:
    _DEVICE_KIND = jax.devices()[0].device_kind.lower()
except Exception:  # pragma: no cover - defensive
    _DEVICE_KIND = ""
GELU_BF16 = ("v6" in _DEVICE_KIND) or ("v7" in _DEVICE_KIND)

# ------------- single-buffering probe for constant-index weight operands ------------
_BUFFERED_OK = False


def probe_single_buffered_weights():
    """Check once (outside jit) whether pipeline_mode=pl.Buffered(1) works here.
    Constant-index operands gain nothing from double buffering; single-buffering them
    is the biggest VMEM lever and a prerequisite for large row tiles on v7x."""
    global _BUFFERED_OK
    try:
        def k(x_ref, w_ref, o_ref):
            o_ref[...] = x_ref[...] + w_ref[...]

        x = jnp.arange(32 * 128, dtype=jnp.float32).reshape(32, 128)
        w = jnp.ones((8, 128), jnp.float32)
        y = pl.pallas_call(
            k,
            out_shape=jax.ShapeDtypeStruct((32, 128), jnp.float32),
            grid=(4,),
            in_specs=[
                pl.BlockSpec((8, 128), lambda i: (i, 0)),
                pl.BlockSpec((8, 128), lambda i: (0, 0),
                             pipeline_mode=pl.Buffered(1)),
            ],
            out_specs=pl.BlockSpec((8, 128), lambda i: (i, 0)),
        )(x, w)
        _BUFFERED_OK = bool(jnp.allclose(jax.block_until_ready(y), x + 1.0))
    except Exception:
        _BUFFERED_OK = False
    return _BUFFERED_OK


def _const_spec(block_shape, index_map):
    """BlockSpec for operands whose index_map is constant across the grid."""
    if _BUFFERED_OK:
        return pl.BlockSpec(block_shape, index_map, pipeline_mode=pl.Buffered(1))
    return pl.BlockSpec(block_shape, index_map)


def _layernorm_f32(x, g, b):
    mu = jnp.mean(x, axis=-1, keepdims=True)
    var = jnp.mean(jnp.square(x - mu), axis=-1, keepdims=True)
    return (x - mu) * jax.lax.rsqrt(var + LN_EPS) * g + b


# ------------------------------ kernel A: LN1 + QKV ---------------------------------

def _ln_qkv_kernel(x_ref, g_ref, b_ref, w_ref, bias_ref, qkv_ref):
    x = x_ref[...].astype(jnp.float32)
    h = _layernorm_f32(x, g_ref[...], b_ref[...])
    acc = jnp.dot(h.astype(jnp.bfloat16), w_ref[...],
                  preferred_element_type=jnp.float32) + bias_ref[...]
    qkv_ref[...] = acc.astype(qkv_ref.dtype)


def ln_qkv_proj(x2d, g, b, w_qkv, b_qkv, *, tm):
    M, D = x2d.shape
    N3 = w_qkv.shape[1]
    assert M % tm == 0
    return pl.pallas_call(
        _ln_qkv_kernel,
        out_shape=jax.ShapeDtypeStruct((M, N3), jnp.bfloat16),
        grid=(M // tm,),
        in_specs=[
            pl.BlockSpec((tm, D), lambda i: (i, 0)),
            _const_spec((1, D), lambda i: (0, 0)),
            _const_spec((1, D), lambda i: (0, 0)),
            _const_spec((D, N3), lambda i: (0, 0)),
            _const_spec((1, N3), lambda i: (0, 0)),
        ],
        out_specs=pl.BlockSpec((tm, N3), lambda i: (i, 0)),
        compiler_params=pltpu.CompilerParams(
            dimension_semantics=("parallel",), vmem_limit_bytes=VMEM_LIMIT),
    )(x2d,
      g.reshape(1, D).astype(jnp.float32),
      b.reshape(1, D).astype(jnp.float32),
      w_qkv,
      b_qkv.reshape(1, N3).astype(jnp.float32))


# -------------------- kernel B: attention + out-proj + residual ---------------------

def _attn_kernel(qkv_ref, x_ref, wo_ref, bo_ref, o_ref, oh_ref, *, n_heads, scale):
    NB, S, D = x_ref.shape
    Dh = D // n_heads

    # causal mask built in-kernel, once per class block (no (S,S) operand DMA)
    row = jax.lax.broadcasted_iota(jnp.int32, (S, S), 0)
    col = jax.lax.broadcasted_iota(jnp.int32, (S, S), 1)
    allow = (col <= row)[None]                                   # (1, S, S)

    for h in range(n_heads):                                     # static unrolled loop
        qh = qkv_ref[:, :, h * Dh:(h + 1) * Dh]                  # (NB, S, Dh) bf16
        kh = qkv_ref[:, :, D + h * Dh:D + (h + 1) * Dh]
        vh = qkv_ref[:, :, 2 * D + h * Dh:2 * D + (h + 1) * Dh]
        s = jnp.einsum("bqd,bkd->bqk", qh, kh,
                       preferred_element_type=jnp.float32) * scale
        s = jnp.where(allow, s, -1e9)
        s = s - jnp.max(s, axis=-1, keepdims=True)
        p = jnp.exp(s)
        p = p * pl.reciprocal(jnp.sum(p, axis=-1, keepdims=True), approx=True)
        oh = jnp.einsum("bqk,bkd->bqd", p.astype(jnp.bfloat16), vh,
                        preferred_element_type=jnp.float32)       # (NB, S, Dh)
        # stage this head's output into its column range of the merged bf16 buffer
        oh_ref[:, :, h * Dh:(h + 1) * Dh] = oh.astype(jnp.bfloat16)

    # ONE (NB*S, D) x (D, D) out-projection: contraction K = D keeps the MXU fully fed
    merged = oh_ref[...].reshape(NB * S, D)
    proj = jnp.dot(merged, wo_ref[...], preferred_element_type=jnp.float32)
    xin = x_ref[...].astype(jnp.float32).reshape(NB * S, D)
    out = xin + proj + bo_ref[...]
    o_ref[...] = out.reshape(NB, S, D).astype(o_ref.dtype)


def attn_outproj_residual(qkv, x, w_out, b_out, *, n_heads, scale, nb):
    Np, S, D3 = qkv.shape
    D = x.shape[-1]
    assert Np % nb == 0
    return pl.pallas_call(
        partial(_attn_kernel, n_heads=n_heads, scale=scale),
        out_shape=jax.ShapeDtypeStruct((Np, S, D), x.dtype),
        grid=(Np // nb,),
        in_specs=[
            pl.BlockSpec((nb, S, D3), lambda n: (n, 0, 0)),
            pl.BlockSpec((nb, S, D), lambda n: (n, 0, 0)),
            _const_spec((D, D), lambda n: (0, 0)),
            _const_spec((1, D), lambda n: (0, 0)),
        ],
        out_specs=pl.BlockSpec((nb, S, D), lambda n: (n, 0, 0)),
        scratch_shapes=[pltpu.VMEM((nb, S, D), jnp.bfloat16)],
        compiler_params=pltpu.CompilerParams(
            dimension_semantics=("parallel",), vmem_limit_bytes=VMEM_LIMIT),
    )(qkv, x, w_out, b_out.reshape(1, D).astype(jnp.float32))


# ----------------------- kernel C: LN2 + MLP + residual -----------------------------

def _ln_mlp_kernel(x_ref, g_ref, b_ref, w1_ref, b1_ref, w2_ref, b2_ref, o_ref,
                   *, gelu_bf16):
    x = x_ref[...].astype(jnp.float32)
    h = _layernorm_f32(x, g_ref[...], b_ref[...])
    h1 = jnp.dot(h.astype(jnp.bfloat16), w1_ref[...],
                 preferred_element_type=jnp.float32) + b1_ref[...]
    if gelu_bf16:   # bf16 EUP on v6e/v7x halves sigmoid slot pressure
        sig = jax.nn.sigmoid((1.702 * h1).astype(jnp.bfloat16)).astype(jnp.float32)
    else:           # v5e/v4: no bf16 EUP, keep fp32
        sig = jax.nn.sigmoid(1.702 * h1)
    h1 = h1 * sig                                                # QuickGELU
    h2 = jnp.dot(h1.astype(jnp.bfloat16), w2_ref[...],
                 preferred_element_type=jnp.float32) + b2_ref[...]
    o_ref[...] = (x + h2).astype(o_ref.dtype)


def ln_mlp_residual(x2d, g, b, w1, b1, w2, b2, *, tm):
    M, D = x2d.shape
    Dff = w1.shape[1]
    assert M % tm == 0
    return pl.pallas_call(
        partial(_ln_mlp_kernel, gelu_bf16=GELU_BF16),
        out_shape=jax.ShapeDtypeStruct((M, D), ACT_DTYPE),
        grid=(M // tm,),
        in_specs=[
            pl.BlockSpec((tm, D), lambda i: (i, 0)),
            _const_spec((1, D), lambda i: (0, 0)),
            _const_spec((1, D), lambda i: (0, 0)),
            _const_spec((D, Dff), lambda i: (0, 0)),
            _const_spec((1, Dff), lambda i: (0, 0)),
            _const_spec((Dff, D), lambda i: (0, 0)),
            _const_spec((1, D), lambda i: (0, 0)),
        ],
        out_specs=pl.BlockSpec((tm, D), lambda i: (i, 0)),
        compiler_params=pltpu.CompilerParams(
            dimension_semantics=("parallel",), vmem_limit_bytes=VMEM_LIMIT),
    )(x2d,
      g.reshape(1, D).astype(jnp.float32), b.reshape(1, D).astype(jnp.float32),
      w1, b1.reshape(1, Dff).astype(jnp.float32),
      w2, b2.reshape(1, D).astype(jnp.float32))


# --------------- kernel D: final LayerNorm + text projection (no bias) --------------

def _ln_proj_kernel(x_ref, g_ref, b_ref, w_ref, o_ref):
    x = x_ref[...].astype(jnp.float32)
    h = _layernorm_f32(x, g_ref[...], b_ref[...])
    o_ref[...] = jnp.dot(h.astype(jnp.bfloat16), w_ref[...],
                         preferred_element_type=jnp.float32).astype(o_ref.dtype)


def ln_text_proj(x_eot, g, b, w_proj):
    N, D = x_eot.shape
    E = w_proj.shape[1]
    tm = min(256, pl.cdiv(N, 8) * 8)          # row-tiled so large class counts pipeline
    Np = pl.cdiv(N, tm) * tm
    if Np != N:
        x_eot = jnp.pad(x_eot, ((0, Np - N), (0, 0)))
    out = pl.pallas_call(
        _ln_proj_kernel,
        out_shape=jax.ShapeDtypeStruct((Np, E), ACT_DTYPE),
        grid=(Np // tm,),
        in_specs=[
            pl.BlockSpec((tm, D), lambda i: (i, 0)),
            _const_spec((1, D), lambda i: (0, 0)),
            _const_spec((1, D), lambda i: (0, 0)),
            _const_spec((D, E), lambda i: (0, 0)),
        ],
        out_specs=pl.BlockSpec((tm, E), lambda i: (i, 0)),
        compiler_params=pltpu.CompilerParams(
            dimension_semantics=("parallel",), vmem_limit_bytes=VMEM_LIMIT),
    )(x_eot,
      g.reshape(1, D).astype(jnp.float32),
      b.reshape(1, D).astype(jnp.float32),
      w_proj)
    return out[:N] if Np != N else out


# ----------------------------------- model glue -------------------------------------

def text_encoder_forward(params, prompts, tokenized_prompts,
                         compound_prompts_deeper_text, *, n_heads, n_ctx):
    N, S0, D = prompts.shape

    # Pad the sequence to a multiple of 8 ONCE (sublane alignment). Pad keys sit after
    # every real query so the causal mask keeps them invisible; pad rows are never
    # gathered (EOT positions < S0).
    S = pl.cdiv(S0, 8) * 8
    pos = params["positional_embedding"]
    if S != S0:
        prompts = jnp.pad(prompts, ((0, 0), (0, S - S0), (0, 0)))
        pos = jnp.pad(pos, ((0, S - S0), (0, 0)))
    x = (prompts + pos[None]).astype(ACT_DTYPE)                   # (N, S, D)
    # Original permutes to (S, N, D); batch-first here is the same math
    # (per-token LN/MLP, per-sequence attention) — no data movement needed.

    # Class block: ~ROW_TILE rows per grid step. Pad the class dim ONCE and keep the
    # padded shape end-to-end so per-layer kernels never pad/slice activations in HBM.
    NB = max(1, min(N, ROW_TILE // S))
    Np = pl.cdiv(N, NB) * NB
    if Np != N:
        x = jnp.pad(x, ((0, Np - N), (0, 0), (0, 0)))
    M = Np * S
    tm = NB * S                                                   # divides M exactly

    scale = 1.0 / math.sqrt(D // n_heads)
    counter = 0
    for i, lp in enumerate(params["layers"]):
        if i > 0 and counter < len(compound_prompts_deeper_text):
            # overwrite only rows [1, 1+n_ctx) — no full-activation concat round trip
            ctx = compound_prompts_deeper_text[counter].astype(x.dtype)   # (n_ctx, D)
            ctx_b = jnp.broadcast_to(ctx[None], (Np, n_ctx, D))
            x = jax.lax.dynamic_update_slice(x, ctx_b, (0, 1, 0))
            counter += 1
        qkv = ln_qkv_proj(x.reshape(M, D), lp["ln1_g"], lp["ln1_b"],
                          lp["w_qkv"], lp["b_qkv"], tm=tm).reshape(Np, S, 3 * D)
        x = attn_outproj_residual(qkv, x, lp["w_out"], lp["b_out"],
                                  n_heads=n_heads, scale=scale, nb=NB)
        x = ln_mlp_residual(x.reshape(M, D), lp["ln2_g"], lp["ln2_b"],
                            lp["w_fc1"], lp["b_fc1"],
                            lp["w_fc2"], lp["b_fc2"], tm=tm).reshape(Np, S, D)

    eot = jnp.argmax(tokenized_prompts, axis=-1)                  # EOT token positions
    x_eot = x[:N][jnp.arange(N), eot]                             # (N, D) gather (glue)
    # ln_final is per-row, so gather-then-LN == LN-then-gather (saves S-1 tokens of work)
    return ln_text_proj(x_eot, params["ln_final_g"], params["ln_final_b"],
                        params["text_projection"])


def init_params(key, n_layers, d_model, seq_len, embed_dim, n_heads):
    # Weights stored pre-transposed in bf16 (kernel layout) at parameter-load time so
    # the forward pass never emits an XLA transpose.
    keys = jax.random.split(key, 2 + n_layers)
    params = {
        "positional_embedding": 0.01 * jax.random.normal(keys[0], (seq_len, d_model), jnp.float32),
        "ln_final_g": jnp.ones((d_model,), jnp.float32),
        "ln_final_b": jnp.zeros((d_model,), jnp.float32),
        "text_projection": (0.02 * jax.random.normal(keys[1], (d_model, embed_dim))).astype(W_DTYPE),
        "layers": [],
    }
    for i in range(n_layers):
        lk = jax.random.split(keys[2 + i], 4)
        params["layers"].append(dict(
            ln1_g=jnp.ones((d_model,), jnp.float32),
            ln1_b=jnp.zeros((d_model,), jnp.float32),
            # torch in_proj_weight is (3D, D); stored here already as (D, 3D)
            w_qkv=(0.02 * jax.random.normal(lk[0], (d_model, 3 * d_model))).astype(W_DTYPE),
            b_qkv=jnp.zeros((3 * d_model,), jnp.float32),
            # torch out_proj.weight (D, D) stored transposed: y = attn_out @ w_out + b
            w_out=(0.02 * jax.random.normal(lk[1], (d_model, d_model))).astype(W_DTYPE),
            b_out=jnp.zeros((d_model,), jnp.float32),
            ln2_g=jnp.ones((d_model,), jnp.float32),
            ln2_b=jnp.zeros((d_model,), jnp.float32),
            w_fc1=(0.02 * jax.random.normal(lk[2], (d_model, 4 * d_model))).astype(W_DTYPE),
            b_fc1=jnp.zeros((4 * d_model,), jnp.float32),
            w_fc2=(0.02 * jax.random.normal(lk[3], (4 * d_model, d_model))).astype(W_DTYPE),
            b_fc2=jnp.zeros((d_model,), jnp.float32),
        ))
    return params


if __name__ == "__main__":
    n_cls, seq_len, d_model, n_heads = 2, 8, 32, 4
    n_layers, n_ctx, embed_dim = 2, 2, 32

    # Enable single-buffered constant weights if this JAX/Mosaic build supports it.
    probe_single_buffered_weights()

    key = jax.random.PRNGKey(0)
    k1, k2, k3, k4 = jax.random.split(key, 4)

    params = init_params(k1, n_layers, d_model, seq_len, embed_dim, n_heads)
    prompts = 0.02 * jax.random.normal(k2, (n_cls, seq_len, d_model), jnp.float32)
    tokenized_prompts = jax.random.randint(k3, (n_cls, seq_len), 1, 400)
    tokenized_prompts = tokenized_prompts.at[:, 5].set(49407)   # EOT has the largest id
    compound_prompts_deeper_text = [
        0.02 * jax.random.normal(k4, (n_ctx, d_model), jnp.float32)
        for _ in range(n_layers - 1)
    ]

    fwd = jax.jit(partial(text_encoder_forward, n_heads=n_heads, n_ctx=n_ctx))
    out = fwd(params, prompts, tokenized_prompts, compound_prompts_deeper_text)
    out = jax.block_until_ready(out)
    assert out.shape == (n_cls, embed_dim)
    assert bool(jnp.all(jnp.isfinite(out)))
    print("KERNEL_OK")
</pallas_src>

<mosaic_0001>
module attributes {stable_mosaic.version = 11 : i64} {
  func.func @k(%arg0: i32, %arg1: memref<8x128xf32, #tpu.memory_space<vmem>>, %arg2: memref<8x128xf32, #tpu.memory_space<vmem>>, %arg3: memref<8x128xf32, #tpu.memory_space<vmem>>) attributes {dimension_semantics = [#tpu.dimension_semantics<arbitrary>], iteration_bounds = array<i64: 4>, scalar_prefetch = 0 : i64, scratch_operands = 0 : i64, tpu.core_type = #tpu.core_type<tc>, window_params = [{transform_indices = @transform_0, window_bounds = array<i64: 8, 128>}, {pipeline_mode = #tpu.pipeline_mode<synchronous>, transform_indices = @transform_1, window_bounds = array<i64: 8, 128>}, {transform_indices = @transform_2, window_bounds = array<i64: 8, 128>}]} {
    %c0 = arith.constant 0 : index
    %c0_0 = arith.constant 0 : index
    %0 = vector.load %arg1[%c0, %c0_0] : memref<8x128xf32, #tpu.memory_space<vmem>>, vector<8x128xf32>
    %c0_1 = arith.constant 0 : index
    %c0_2 = arith.constant 0 : index
    %1 = vector.load %arg2[%c0_1, %c0_2] : memref<8x128xf32, #tpu.memory_space<vmem>>, vector<8x128xf32>
    %2 = arith.addf %0, %1 : vector<8x128xf32>
    %c0_3 = arith.constant 0 : index
    %c0_4 = arith.constant 0 : index
    %3 = vector.load %arg3[%c0_3, %c0_4] : memref<8x128xf32, #tpu.memory_space<vmem>>, vector<8x128xf32>
    tpu.vector_store %arg3[%c0_3, %c0_4], %2 {strides = array<i32>} : memref<8x128xf32, #tpu.memory_space<vmem>>, vector<8x128xf32>,
    return
  }
  func.func @transform_0(%arg0: i32) -> (i32, i32) {
    %c0_i32 = arith.constant 0 : i32
    %c0_i32_0 = arith.constant 0 : i32
    return %arg0, %c0_i32 : i32, i32
  }
  func.func @transform_1(%arg0: i32) -> (i32, i32) {
    %c0_i32 = arith.constant 0 : i32
    %c0_i32_0 = arith.constant 0 : i32
    %c0_i32_1 = arith.constant 0 : i32
    return %c0_i32, %c0_i32_0 : i32, i32
  }
  func.func @transform_2(%arg0: i32) -> (i32, i32) {
    %c0_i32 = arith.constant 0 : i32
    %c0_i32_0 = arith.constant 0 : i32
    return %arg0, %c0_i32 : i32, i32
  }
}

module attributes {stable_mosaic.version = 11 : i64} {
  func.func @_attn_kernel(%arg0: i32, %arg1: memref<2x8x96xbf16, #tpu.memory_space<vmem>>, %arg2: memref<2x8x32xf32, #tpu.memory_space<vmem>>, %arg3: memref<32x32xbf16, #tpu.memory_space<vmem>>, %arg4: memref<1x32xf32, #tpu.memory_space<vmem>>, %arg5: memref<2x8x32xf32, #tpu.memory_space<vmem>>, %arg6: memref<2x8x32xbf16, #tpu.memory_space<vmem>>) attributes {dimension_semantics = [#tpu.dimension_semantics<parallel>], iteration_bounds = array<i64: 1>, scalar_prefetch = 0 : i64, scratch_operands = 1 : i64, tpu.core_type = #tpu.core_type<tc>, window_params = [{transform_indices = @transform_0, window_bounds = array<i64: 2, 8, 96>}, {transform_indices = @transform_1, window_bounds = array<i64: 2, 8, 32>}, {pipeline_mode = #tpu.pipeline_mode<synchronous>, transform_indices = @transform_2, window_bounds = array<i64: 32, 32>}, {pipeline_mode = #tpu.pipeline_mode<synchronous>, transform_indices = @transform_3, window_bounds = array<i64: 1, 32>}, {transform_indices = @transform_4, window_bounds = array<i64: 2, 8, 32>}]} {
    %0 = tpu.iota {dimensions = array<i32: 0>} : vector<8x8xi32>
    %1 = tpu.iota {dimensions = array<i32: 1>} : vector<8x8xi32>
    %2 = arith.cmpi sle, %1, %0 : vector<8x8xi32>
    %3 = vector.shape_cast %2 : vector<8x8xi1> to vector<1x8x8xi1>
    %c0 = arith.constant 0 : index
    %c0_0 = arith.constant 0 : index
    %c0_1 = arith.constant 0 : index
    %4 = vector.load %arg1[%c0, %c0_0, %c0_1] : memref<2x8x96xbf16, #tpu.memory_space<vmem>>, vector<2x8x8xbf16>
    %c0_2 = arith.constant 0 : index
    %c0_3 = arith.constant 0 : index
    %c32 = arith.constant 32 : index
    %5 = vector.load %arg1[%c0_2, %c0_3, %c32] : memref<2x8x96xbf16, #tpu.memory_space<vmem>>, vector<2x8x8xbf16>
    %c0_4 = arith.constant 0 : index
    %c0_5 = arith.constant 0 : index
    %c64 = arith.constant 64 : index
    %6 = vector.load %arg1[%c0_4, %c0_5, %c64] : memref<2x8x96xbf16, #tpu.memory_space<vmem>>, vector<2x8x8xbf16>
    "tpu.trace_start"() <{level = 10 : i32, message = "bqd,bkd->bqk"}> : () -> ()
    %cst = arith.constant dense<0.000000e+00> : vector<2x8x8xf32>
    %7 = tpu.matmul %4, %5, %cst {dimension_numbers = #tpu.dot_dimension_numbers<[2], [2], [1], [1], [0, 0, 0, 1, 1, 1], [0], [0]>} : vector<2x8x8xbf16>, vector<2x8x8xbf16>, vector<2x8x8xf32> -> vector<2x8x8xf32>
    "tpu.trace_stop"() : () -> ()
    %cst_6 = arith.constant 0.353553385 : f32
    %8 = vector.broadcast %cst_6 : f32 to vector<2x8x8xf32>
    %9 = arith.mulf %7, %8 : vector<2x8x8xf32>
    %cst_7 = arith.constant -1.000000e+09 : f32
    %10 = vector.shape_cast %3 : vector<1x8x8xi1> to vector<1x8x8xi1>
    %11 = vector.broadcast %10 : vector<1x8x8xi1> to vector<2x8x8xi1>
    %12 = vector.broadcast %cst_7 : f32 to vector<2x8x8xf32>
    %13 = arith.select %11, %9, %12 : vector<2x8x8xi1>, vector<2x8x8xf32>
    %cst_8 = arith.constant dense<0xFF800000> : vector<2x8xf32>
    %14 = vector.multi_reduction <maximumf>, %13, %cst_8 [2] : vector<2x8x8xf32> to vector<2x8xf32>
    %15 = vector.shape_cast %14 : vector<2x8xf32> to vector<2x8x1xf32>
    %16 = vector.broadcast %15 : vector<2x8x1xf32> to vector<2x8x8xf32>
    %17 = arith.subf %13, %16 : vector<2x8x8xf32>
    %18 = math.exp %17 : vector<2x8x8xf32>
    %cst_9 = arith.constant dense<0.000000e+00> : vector<2x8xf32>
    %19 = vector.multi_reduction <add>, %18, %cst_9 [2] : vector<2x8x8xf32> to vector<2x8xf32>
    %20 = vector.shape_cast %19 : vector<2x8xf32> to vector<2x8x1xf32>
    %21 = tpu.reciprocal %20 {approx = true} : vector<2x8x1xf32> -> vector<2x8x1xf32>
    %22 = vector.broadcast %21 : vector<2x8x1xf32> to vector<2x8x8xf32>
    %23 = arith.mulf %18, %22 : vector<2x8x8xf32>
    %24 = arith.truncf %23 : vector<2x8x8xf32> to vector<2x8x8xbf16>
    "tpu.trace_start"() <{level = 10 : i32, message = "bqk,bkd->bqd"}> : () -> ()
    %cst_10 = arith.constant dense<0.000000e+00> : vector<2x8x8xf32>
    %25 = tpu.matmul %24, %6, %cst_10 {dimension_numbers = #tpu.dot_dimension_numbers<[2], [1], [1], [2], [0, 0, 0, 1, 1, 2], [0], [0]>} : vector<2x8x8xbf16>, vector<2x8x8xbf16>, vector<2x8x8xf32> -> vector<2x8x8xf32>
    "tpu.trace_stop"() : () -> ()
    %26 = arith.truncf %25 : vector<2x8x8xf32> to vector<2x8x8xbf16>
    %c0_11 = arith.constant 0 : index
    %c0_12 = arith.constant 0 : index
    %c0_13 = arith.constant 0 : index
    %27 = vector.load %arg6[%c0_11, %c0_12, %c0_13] : memref<2x8x32xbf16, #tpu.memory_space<vmem>>, vector<2x8x8xbf16>
    tpu.vector_store %arg6[%c0_11, %c0_12, %c0_13], %26 {strides = array<i32>} : memref<2x8x32xbf16, #tpu.memory_space<vmem>>, vector<2x8x8xbf16>,
    %c0_14 = arith.constant 0 : index
    %c0_15 = arith.constant 0 : index
    %c8 = arith.constant 8 : index
    %28 = vector.load %arg1[%c0_14, %c0_15, %c8] : memref<2x8x96xbf16, #tpu.memory_space<vmem>>, vector<2x8x8xbf16>
    %c0_16 = arith.constant 0 : index
    %c0_17 = arith.constant 0 : index
    %c40 = arith.constant 40 : index
    %29 = vector.load %arg1[%c0_16, %c0_17, %c40] : memref<2x8x96xbf16, #tpu.memory_space<vmem>>, vector<2x8x8xbf16>
    %c0_18 = arith.constant 0 : index
    %c0_19 = arith.constant 0 : index
    %c72 = arith.constant 72 : index
    %30 = vector.load %arg1[%c0_18, %c0_19, %c72] : memref<2x8x96xbf16, #tpu.memory_space<vmem>>, vector<2x8x8xbf16>
    "tpu.trace_start"() <{level = 10 : i32, message = "bqd,bkd->bqk"}> : () -> ()
    %cst_20 = arith.constant dense<0.000000e+00> : vector<2x8x8xf32>
    %31 = tpu.matmul %28, %29, %cst_20 {dimension_numbers = #tpu.dot_dimension_numbers<[2], [2], [1], [1], [0, 0, 0, 1, 1, 1], [0], [0]>} : vector<2x8x8xbf16>, vector<2x8x8xbf16>, vector<2x8x8xf32> -> vector<2x8x8xf32>
    "tpu.trace_stop"() : () -> ()
    %cst_21 = arith.constant 0.353553385 : f32
    %32 = vector.broadcast %cst_21 : f32 to vector<2x8x8xf32>
    %33 = arith.mulf %31, %32 : vector<2x8x8xf32>
    %cst_22 = arith.constant -1.000000e+09 : f32
    %34 = vector.shape_cast %3 : vector<1x8x8xi1> to vector<1x8x8xi1>
    %35 = vector.broadcast %34 : vector<1x8x8xi1> to vector<2x8x8xi1>
    %36 = vector.broadcast %cst_22 : f32 to vector<2x8x8xf32>
    %37 = arith.select %35, %33, %36 : vector<2x8x8xi1>, vector<2x8x8xf32>
    %cst_23 = arith.constant dense<0xFF800000> : vector<2x8xf32>
    %38 = vector.multi_reduction <maximumf>, %37, %cst_23 [2] : vector<2x8x8xf32> to vector<2x8xf32>
    %39 = vector.shape_cast %38 : vector<2x8xf32> to vector<2x8x1xf32>
    %40 = vector.broadcast %39 : vector<2x8x1xf32> to vector<2x8x8xf32>
    %41 = arith.subf %37, %40 : vector<2x8x8xf32>
    %42 = math.exp %41 : vector<2x8x8xf32>
    %cst_24 = arith.constant dense<0.000000e+00> : vector<2x8xf32>
    %43 = vector.multi_reduction <add>, %42, %cst_24 [2] : vector<2x8x8xf32> to vector<2x8xf32>
    %44 = vector.shape_cast %43 : vector<2x8xf32> to vector<2x8x1xf32>
    %45 = tpu.reciprocal %44 {approx = true} : vector<2x8x1xf32> -> vector<2x8x1xf32>
    %46 = vector.broadcast %45 : vector<2x8x1xf32> to vector<2x8x8xf32>
    %47 = arith.mulf %42, %46 : vector<2x8x8xf32>
    %48 = arith.truncf %47 : vector<2x8x8xf32> to vector<2x8x8xbf16>
    "tpu.trace_start"() <{level = 10 : i32, message = "bqk,bkd->bqd"}> : () -> ()
    %cst_25 = arith.constant dense<0.000000e+00> : vector<2x8x8xf32>
    %49 = tpu.matmul %48, %30, %cst_25 {dimension_numbers = #tpu.dot_dimension_numbers<[2], [1], [1], [2], [0, 0, 0, 1, 1, 2], [0], [0]>} : vector<2x8x8xbf16>, vector<2x8x8xbf16>, vector<2x8x8xf32> -> vector<2x8x8xf32>
    "tpu.trace_stop"() : () -> ()
    %50 = arith.truncf %49 : vector<2x8x8xf32> to vector<2x8x8xbf16>
    %c0_26 = arith.constant 0 : index
    %c0_27 = arith.constant 0 : index
    %c8_28 = arith.constant 8 : index
    %51 = vector.load %arg6[%c0_26, %c0_27, %c8_28] : memref<2x8x32xbf16, #tpu.memory_space<vmem>>, vector<2x8x8xbf16>
    tpu.vector_store %arg6[%c0_26, %c0_27, %c8_28], %50 {strides = array<i32>} : memref<2x8x32xbf16, #tpu.memory_space<vmem>>, vector<2x8x8xbf16>,
    %c0_29 = arith.constant 0 : index
    %c0_30 = arith.constant 0 : index
    %c16 = arith.constant 16 : index
    %52 = vector.load %arg1[%c0_29, %c0_30, %c16] : memref<2x8x96xbf16, #tpu.memory_space<vmem>>, vector<2x8x8xbf16>
    %c0_31 = arith.constant 0 : index
    %c0_32 = arith.constant 0 : index
    %c48 = arith.constant 48 : index
    %53 = vector.load %arg1[%c0_31, %c0_32, %c48] : memref<2x8x96xbf16, #tpu.memory_space<vmem>>, vector<2x8x8xbf16>
    %c0_33 = arith.constant 0 : index
    %c0_34 = arith.constant 0 : index
    %c80 = arith.constant 80 : index
    %54 = vector.load %arg1[%c0_33, %c0_34, %c80] : memref<2x8x96xbf16, #tpu.memory_space<vmem>>, vector<2x8x8xbf16>
    "tpu.trace_start"() <{level = 10 : i32, message = "bqd,bkd->bqk"}> : () -> ()
    %cst_35 = arith.constant dense<0.000000e+00> : vector<2x8x8xf32>
    %55 = tpu.matmul %52, %53, %cst_35 {dimension_numbers = #tpu.dot_dimension_numbers<[2], [2], [1], [1], [0, 0, 0, 1, 1, 1], [0], [0]>} : vector<2x8x8xbf16>, vector<2x8x8xbf16>, vector<2x8x8xf32> -> vector<2x8x8xf32>
    "tpu.trace_stop"() : () -> ()
    %cst_36 = arith.constant 0.353553385 : f32
    %56 = vector.broadcast %cst_36 : f32 to vector<2x8x8xf32>
    %57 = arith.mulf %55, %56 : vector<2x8x8xf32>
    %cst_37 = arith.constant -1.000000e+09 : f32
    %58 = vector.shape_cast %3 : vector<1x8x8xi1> to vector<1x8x8xi1>
    %59 = vector.broadcast %58 : vector<1x8x8xi1> to vector<2x8x8xi1>
    %60 = vector.broadcast %cst_37 : f32 to vector<2x8x8xf32>
    %61 = arith.select %59, %57, %60 : vector<2x8x8xi1>, vector<2x8x8xf32>
    %cst_38 = arith.constant dense<0xFF800000> : vector<2x8xf32>
    %62 = vector.multi_reduction <maximumf>, %61, %cst_38 [2] : vector<2x8x8xf32> to vector<2x8xf32>
    %63 = vector.shape_cast %62 : vector<2x8xf32> to vector<2x8x1xf32>
    %64 = vector.broadcast %63 : vector<2x8x1xf32> to vector<2x8x8xf32>
    %65 = arith.subf %61, %64 : vector<2x8x8xf32>
    %66 = math.exp %65 : vector<2x8x8xf32>
    %cst_39 = arith.constant dense<0.000000e+00> : vector<2x8xf32>
    %67 = vector.multi_reduction <add>, %66, %cst_39 [2] : vector<2x8x8xf32> to vector<2x8xf32>
    %68 = vector.shape_cast %67 : vector<2x8xf32> to vector<2x8x1xf32>
    %69 = tpu.reciprocal %68 {approx = true} : vector<2x8x1xf32> -> vector<2x8x1xf32>
    %70 = vector.broadcast %69 : vector<2x8x1xf32> to vector<2x8x8xf32>
    %71 = arith.mulf %66, %70 : vector<2x8x8xf32>
    %72 = arith.truncf %71 : vector<2x8x8xf32> to vector<2x8x8xbf16>
    "tpu.trace_start"() <{level = 10 : i32, message = "bqk,bkd->bqd"}> : () -> ()
    %cst_40 = arith.constant dense<0.000000e+00> : vector<2x8x8xf32>
    %73 = tpu.matmul %72, %54, %cst_40 {dimension_numbers = #tpu.dot_dimension_numbers<[2], [1], [1], [2], [0, 0, 0, 1, 1, 2], [0], [0]>} : vector<2x8x8xbf16>, vector<2x8x8xbf16>, vector<2x8x8xf32> -> vector<2x8x8xf32>
    "tpu.trace_stop"() : () -> ()
    %74 = arith.truncf %73 : vector<2x8x8xf32> to vector<2x8x8xbf16>
    %c0_41 = arith.constant 0 : index
    %c0_42 = arith.constant 0 : index
    %c16_43 = arith.constant 16 : index
    %75 = vector.load %arg6[%c0_41, %c0_42, %c16_43] : memref<2x8x32xbf16, #tpu.memory_space<vmem>>, vector<2x8x8xbf16>
    tpu.vector_store %arg6[%c0_41, %c0_42, %c16_43], %74 {strides = array<i32>} : memref<2x8x32xbf16, #tpu.memory_space<vmem>>, vector<2x8x8xbf16>,
    %c0_44 = arith.constant 0 : index
    %c0_45 = arith.constant 0 : index
    %c24 = arith.constant 24 : index
    %76 = vector.load %arg1[%c0_44, %c0_45, %c24] : memref<2x8x96xbf16, #tpu.memory_space<vmem>>, vector<2x8x8xbf16>
    %c0_46 = arith.constant 0 : index
    %c0_47 = arith.constant 0 : index
    %c56 = arith.constant 56 : index
    %77 = vector.load %arg1[%c0_46, %c0_47, %c56] : memref<2x8x96xbf16, #tpu.memory_space<vmem>>, vector<2x8x8xbf16>
    %c0_48 = arith.constant 0 : index
    %c0_49 = arith.constant 0 : index
    %c88 = arith.constant 88 : index
    %78 = vector.load %arg1[%c0_48, %c0_49, %c88] : memref<2x8x96xbf16, #tpu.memory_space<vmem>>, vector<2x8x8xbf16>
    "tpu.trace_start"() <{level = 10 : i32, message = "bqd,bkd->bqk"}> : () -> ()
    %cst_50 = arith.constant dense<0.000000e+00> : vector<2x8x8xf32>
    %79 = tpu.matmul %76, %77, %cst_50 {dimension_numbers = #tpu.dot_dimension_numbers<[2], [2], [1], [1], [0, 0, 0, 1, 1, 1], [0], [0]>} : vector<2x8x8xbf16>, vector<2x8x8xbf16>, vector<2x8x8xf32> -> vector<2x8x8xf32>
    "tpu.trace_stop"() : () -> ()
    %cst_51 = arith.constant 0.353553385 : f32
    %80 = vector.broadcast %cst_51 : f32 to vector<2x8x8xf32>
    %81 = arith.mulf %79, %80 : vector<2x8x8xf32>
    %cst_52 = arith.constant -1.000000e+09 : f32
    %82 = vector.shape_cast %3 : vector<1x8x8xi1> to vector<1x8x8xi1>
    %83 = vector.broadcast %82 : vector<1x8x8xi1> to vector<2x8x8xi1>
    %84 = vector.broadcast %cst_52 : f32 to vector<2x8x8xf32>
    %85 = arith.select %83, %81, %84 : vector<2x8x8xi1>, vector<2x8x8xf32>
    %cst_53 = arith.constant dense<0xFF800000> : vector<2x8xf32>
    %86 = vector.multi_reduction <maximumf>, %85, %cst_53 [2] : vector<2x8x8xf32> to vector<2x8xf32>
    %87 = vector.shape_cast %86 : vector<2x8xf32> to vector<2x8x1xf32>
    %88 = vector.broadcast %87 : vector<2x8x1xf32> to vector<2x8x8xf32>
    %89 = arith.subf %85, %88 : vector<2x8x8xf32>
    %90 = math.exp %89 : vector<2x8x8xf32>
    %cst_54 = arith.constant dense<0.000000e+00> : vector<2x8xf32>
    %91 = vector.multi_reduction <add>, %90, %cst_54 [2] : vector<2x8x8xf32> to vector<2x8xf32>
    %92 = vector.shape_cast %91 : vector<2x8xf32> to vector<2x8x1xf32>
    %93 = tpu.reciprocal %92 {approx = true} : vector<2x8x1xf32> -> vector<2x8x1xf32>
    %94 = vector.broadcast %93 : vector<2x8x1xf32> to vector<2x8x8xf32>
    %95 = arith.mulf %90, %94 : vector<2x8x8xf32>
    %96 = arith.truncf %95 : vector<2x8x8xf32> to vector<2x8x8xbf16>
    "tpu.trace_start"() <{level = 10 : i32, message = "bqk,bkd->bqd"}> : () -> ()
    %cst_55 = arith.constant dense<0.000000e+00> : vector<2x8x8xf32>
    %97 = tpu.matmul %96, %78, %cst_55 {dimension_numbers = #tpu.dot_dimension_numbers<[2], [1], [1], [2], [0, 0, 0, 1, 1, 2], [0], [0]>} : vector<2x8x8xbf16>, vector<2x8x8xbf16>, vector<2x8x8xf32> -> vector<2x8x8xf32>
    "tpu.trace_stop"() : () -> ()
    %98 = arith.truncf %97 : vector<2x8x8xf32> to vector<2x8x8xbf16>
    %c0_56 = arith.constant 0 : index
    %c0_57 = arith.constant 0 : index
    %c24_58 = arith.constant 24 : index
    %99 = vector.load %arg6[%c0_56, %c0_57, %c24_58] : memref<2x8x32xbf16, #tpu.memory_space<vmem>>, vector<2x8x8xbf16>
    tpu.vector_store %arg6[%c0_56, %c0_57, %c24_58], %98 {strides = array<i32>} : memref<2x8x32xbf16, #tpu.memory_space<vmem>>, vector<2x8x8xbf16>,
    %c0_59 = arith.constant 0 : index
    %c0_60 = arith.constant 0 : index
    %c0_61 = arith.constant 0 : index
    %100 = vector.load %arg6[%c0_59, %c0_60, %c0_61] : memref<2x8x32xbf16, #tpu.memory_space<vmem>>, vector<2x8x32xbf16>
    %101 = vector.shape_cast %100 : vector<2x8x32xbf16> to vector<16x32xbf16>
    %c0_62 = arith.constant 0 : index
    %c0_63 = arith.constant 0 : index
    %102 = vector.load %arg3[%c0_62, %c0_63] : memref<32x32xbf16, #tpu.memory_space<vmem>>, vector<32x32xbf16>
    %cst_64 = arith.constant dense<0.000000e+00> : vector<16x32xf32>
    %103 = tpu.matmul %101, %102, %cst_64 {dimension_numbers = #tpu.dot_dimension_numbers<[1], [0], [0], [1], [0, 0, 1, 1], [], []>} : vector<16x32xbf16>, vector<32x32xbf16>, vector<16x32xf32> -> vector<16x32xf32>
    %c0_65 = arith.constant 0 : index
    %c0_66 = arith.constant 0 : index
    %c0_67 = arith.constant 0 : index
    %104 = vector.load %arg2[%c0_65, %c0_66, %c0_67] : memref<2x8x32xf32, #tpu.memory_space<vmem>>, vector<2x8x32xf32>
    %105 = vector.shape_cast %104 : vector<2x8x32xf32> to vector<16x32xf32>
    %106 = arith.addf %105, %103 : vector<16x32xf32>
    %c0_68 = arith.constant 0 : index
    %c0_69 = arith.constant 0 : index
    %107 = vector.load %arg4[%c0_68, %c0_69] : memref<1x32xf32, #tpu.memory_space<vmem>>, vector<1x32xf32>
    %108 = vector.broadcast %107 : vector<1x32xf32> to vector<16x32xf32>
    %109 = arith.addf %106, %108 : vector<16x32xf32>
    %110 = vector.shape_cast %109 : vector<16x32xf32> to vector<2x8x32xf32>
    %c0_70 = arith.constant 0 : index
    %c0_71 = arith.constant 0 : index
    %c0_72 = arith.constant 0 : index
    %111 = vector.load %arg5[%c0_70, %c0_71, %c0_72] : memref<2x8x32xf32, #tpu.memory_space<vmem>>, vector<2x8x32xf32>
    tpu.vector_store %arg5[%c0_70, %c0_71, %c0_72], %110 {strides = array<i32>} : memref<2x8x32xf32, #tpu.memory_space<vmem>>, vector<2x8x32xf32>,
    return
  }
  func.func @transform_0(%arg0: i32) -> (i32, i32, i32) {
    %c0_i32 = arith.constant 0 : i32
    %c0_i32_0 = arith.constant 0 : i32
    %c0_i32_1 = arith.constant 0 : i32
    return %arg0, %c0_i32, %c0_i32_0 : i32, i32, i32
  }
  func.func @transform_1(%arg0: i32) -> (i32, i32, i32) {
    %c0_i32 = arith.constant 0 : i32
    %c0_i32_0 = arith.constant 0 : i32
    %c0_i32_1 = arith.constant 0 : i32
    return %arg0, %c0_i32, %c0_i32_0 : i32, i32, i32
  }
  func.func @transform_2(%arg0: i32) -> (i32, i32) {
    %c0_i32 = arith.constant 0 : i32
    %c0_i32_0 = arith.constant 0 : i32
    %c0_i32_1 = arith.constant 0 : i32
    return %c0_i32, %c0_i32_0 : i32, i32
  }
  func.func @transform_3(%arg0: i32) -> (i32, i32) {
    %c0_i32 = arith.constant 0 : i32
    %c0_i32_0 = arith.constant 0 : i32
    %c0_i32_1 = arith.constant 0 : i32
    return %c0_i32, %c0_i32_0 : i32, i32
  }
  func.func @transform_4(%arg0: i32) -> (i32, i32, i32) {
    %c0_i32 = arith.constant 0 : i32
    %c0_i32_0 = arith.constant 0 : i32
    %c0_i32_1 = arith.constant 0 : i32
    return %arg0, %c0_i32, %c0_i32_0 : i32, i32, i32
  }
}

module attributes {stable_mosaic.version = 11 : i64} {
  func.func @_ln_qkv_kernel(%arg0: i32, %arg1: memref<16x32xf32, #tpu.memory_space<vmem>>, %arg2: memref<1x32xf32, #tpu.memory_space<vmem>>, %arg3: memref<1x32xf32, #tpu.memory_space<vmem>>, %arg4: memref<32x96xbf16, #tpu.memory_space<vmem>>, %arg5: memref<1x96xf32, #tpu.memory_space<vmem>>, %arg6: memref<16x96xbf16, #tpu.memory_space<vmem>>) attributes {dimension_semantics = [#tpu.dimension_semantics<parallel>], iteration_bounds = array<i64: 1>, scalar_prefetch = 0 : i64, scratch_operands = 0 : i64, tpu.core_type = #tpu.core_type<tc>, window_params = [{transform_indices = @transform_0, window_bounds = array<i64: 16, 32>}, {pipeline_mode = #tpu.pipeline_mode<synchronous>, transform_indices = @transform_1, window_bounds = array<i64: 1, 32>}, {pipeline_mode = #tpu.pipeline_mode<synchronous>, transform_indices = @transform_2, window_bounds = array<i64: 1, 32>}, {pipeline_mode = #tpu.pipeline_mode<synchronous>, transform_indices = @transform_3, window_bounds = array<i64: 32, 96>}, {pipeline_mode = #tpu.pipeline_mode<synchronous>, transform_indices = @transform_4, window_bounds = array<i64: 1, 96>}, {transform_indices = @transform_5, window_bounds = array<i64: 16, 96>}]} {
    %c0 = arith.constant 0 : index
    %c0_0 = arith.constant 0 : index
    %0 = vector.load %arg1[%c0, %c0_0] : memref<16x32xf32, #tpu.memory_space<vmem>>, vector<16x32xf32>
    %c0_1 = arith.constant 0 : index
    %c0_2 = arith.constant 0 : index
    %1 = vector.load %arg2[%c0_1, %c0_2] : memref<1x32xf32, #tpu.memory_space<vmem>>, vector<1x32xf32>
    %c0_3 = arith.constant 0 : index
    %c0_4 = arith.constant 0 : index
    %2 = vector.load %arg3[%c0_3, %c0_4] : memref<1x32xf32, #tpu.memory_space<vmem>>, vector<1x32xf32>
    %cst = arith.constant dense<0.000000e+00> : vector<16xf32>
    %3 = vector.multi_reduction <add>, %0, %cst [1] : vector<16x32xf32> to vector<16xf32>
    %4 = vector.shape_cast %3 : vector<16xf32> to vector<16x1xf32>
    %cst_5 = arith.constant 3.200000e+01 : f32
    %5 = vector.broadcast %cst_5 : f32 to vector<16x1xf32>
    %6 = arith.divf %4, %5 : vector<16x1xf32>
    %7 = vector.broadcast %6 : vector<16x1xf32> to vector<16x32xf32>
    %8 = arith.subf %0, %7 : vector<16x32xf32>
    %9 = arith.mulf %8, %8 : vector<16x32xf32>
    %cst_6 = arith.constant dense<0.000000e+00> : vector<16xf32>
    %10 = vector.multi_reduction <add>, %9, %cst_6 [1] : vector<16x32xf32> to vector<16xf32>
    %11 = vector.shape_cast %10 : vector<16xf32> to vector<16x1xf32>
    %cst_7 = arith.constant 3.200000e+01 : f32
    %12 = vector.broadcast %cst_7 : f32 to vector<16x1xf32>
    %13 = arith.divf %11, %12 : vector<16x1xf32>
    %14 = vector.broadcast %6 : vector<16x1xf32> to vector<16x32xf32>
    %15 = arith.subf %0, %14 : vector<16x32xf32>
    %cst_8 = arith.constant 9.99999974E-6 : f32
    %16 = vector.broadcast %cst_8 : f32 to vector<16x1xf32>
    %17 = arith.addf %13, %16 : vector<16x1xf32>
    %18 = math.rsqrt %17 : vector<16x1xf32>
    %19 = vector.broadcast %18 : vector<16x1xf32> to vector<16x32xf32>
    %20 = arith.mulf %15, %19 : vector<16x32xf32>
    %21 = vector.broadcast %1 : vector<1x32xf32> to vector<16x32xf32>
    %22 = arith.mulf %20, %21 : vector<16x32xf32>
    %23 = vector.broadcast %2 : vector<1x32xf32> to vector<16x32xf32>
    %24 = arith.addf %22, %23 : vector<16x32xf32>
    %25 = arith.truncf %24 : vector<16x32xf32> to vector<16x32xbf16>
    %c0_9 = arith.constant 0 : index
    %c0_10 = arith.constant 0 : index
    %26 = vector.load %arg4[%c0_9, %c0_10] : memref<32x96xbf16, #tpu.memory_space<vmem>>, vector<32x96xbf16>
    %cst_11 = arith.constant dense<0.000000e+00> : vector<16x96xf32>
    %27 = tpu.matmul %25, %26, %cst_11 {dimension_numbers = #tpu.dot_dimension_numbers<[1], [0], [0], [1], [0, 0, 1, 1], [], []>} : vector<16x32xbf16>, vector<32x96xbf16>, vector<16x96xf32> -> vector<16x96xf32>
    %c0_12 = arith.constant 0 : index
    %c0_13 = arith.constant 0 : index
    %28 = vector.load %arg5[%c0_12, %c0_13] : memref<1x96xf32, #tpu.memory_space<vmem>>, vector<1x96xf32>
    %29 = vector.broadcast %28 : vector<1x96xf32> to vector<16x96xf32>
    %30 = arith.addf %27, %29 : vector<16x96xf32>
    %31 = arith.truncf %30 : vector<16x96xf32> to vector<16x96xbf16>
    %c0_14 = arith.constant 0 : index
    %c0_15 = arith.constant 0 : index
    %32 = vector.load %arg6[%c0_14, %c0_15] : memref<16x96xbf16, #tpu.memory_space<vmem>>, vector<16x96xbf16>
    tpu.vector_store %arg6[%c0_14, %c0_15], %31 {strides = array<i32>} : memref<16x96xbf16, #tpu.memory_space<vmem>>, vector<16x96xbf16>,
    return
  }
  func.func @transform_0(%arg0: i32) -> (i32, i32) {
    %c0_i32 = arith.constant 0 : i32
    %c0_i32_0 = arith.constant 0 : i32
    return %arg0, %c0_i32 : i32, i32
  }
  func.func @transform_1(%arg0: i32) -> (i32, i32) {
    %c0_i32 = arith.constant 0 : i32
    %c0_i32_0 = arith.constant 0 : i32
    %c0_i32_1 = arith.constant 0 : i32
    return %c0_i32, %c0_i32_0 : i32, i32
  }
  func.func @transform_2(%arg0: i32) -> (i32, i32) {
    %c0_i32 = arith.constant 0 : i32
    %c0_i32_0 = arith.constant 0 : i32
    %c0_i32_1 = arith.constant 0 : i32
    return %c0_i32, %c0_i32_0 : i32, i32
  }
  func.func @transform_3(%arg0: i32) -> (i32, i32) {
    %c0_i32 = arith.constant 0 : i32
    %c0_i32_0 = arith.constant 0 : i32
    %c0_i32_1 = arith.constant 0 : i32
    return %c0_i32, %c0_i32_0 : i32, i32
  }
  func.func @transform_4(%arg0: i32) -> (i32, i32) {
    %c0_i32 = arith.constant 0 : i32
    %c0_i32_0 = arith.constant 0 : i32
    %c0_i32_1 = arith.constant 0 : i32
    return %c0_i32, %c0_i32_0 : i32, i32
  }
  func.func @transform_5(%arg0: i32) -> (i32, i32) {
    %c0_i32 = arith.constant 0 : i32
    %c0_i32_0 = arith.constant 0 : i32
    return %arg0, %c0_i32 : i32, i32
  }
}

module attributes {stable_mosaic.version = 11 : i64} {
  func.func @_ln_mlp_kernel(%arg0: i32, %arg1: memref<16x32xf32, #tpu.memory_space<vmem>>, %arg2: memref<1x32xf32, #tpu.memory_space<vmem>>, %arg3: memref<1x32xf32, #tpu.memory_space<vmem>>, %arg4: memref<32x128xbf16, #tpu.memory_space<vmem>>, %arg5: memref<1x128xf32, #tpu.memory_space<vmem>>, %arg6: memref<128x32xbf16, #tpu.memory_space<vmem>>, %arg7: memref<1x32xf32, #tpu.memory_space<vmem>>, %arg8: memref<16x32xf32, #tpu.memory_space<vmem>>) attributes {dimension_semantics = [#tpu.dimension_semantics<parallel>], iteration_bounds = array<i64: 1>, scalar_prefetch = 0 : i64, scratch_operands = 0 : i64, tpu.core_type = #tpu.core_type<tc>, window_params = [{transform_indices = @transform_0, window_bounds = array<i64: 16, 32>}, {pipeline_mode = #tpu.pipeline_mode<synchronous>, transform_indices = @transform_1, window_bounds = array<i64: 1, 32>}, {pipeline_mode = #tpu.pipeline_mode<synchronous>, transform_indices = @transform_2, window_bounds = array<i64: 1, 32>}, {pipeline_mode = #tpu.pipeline_mode<synchronous>, transform_indices = @transform_3, window_bounds = array<i64: 32, 128>}, {pipeline_mode = #tpu.pipeline_mode<synchronous>, transform_indices = @transform_4, window_bounds = array<i64: 1, 128>}, {pipeline_mode = #tpu.pipeline_mode<synchronous>, transform_indices = @transform_5, window_bounds = array<i64: 128, 32>}, {pipeline_mode = #tpu.pipeline_mode<synchronous>, transform_indices = @transform_6, window_bounds = array<i64: 1, 32>}, {transform_indices = @transform_7, window_bounds = array<i64: 16, 32>}]} {
    %c0 = arith.constant 0 : index
    %c0_0 = arith.constant 0 : index
    %0 = vector.load %arg1[%c0, %c0_0] : memref<16x32xf32, #tpu.memory_space<vmem>>, vector<16x32xf32>
    %c0_1 = arith.constant 0 : index
    %c0_2 = arith.constant 0 : index
    %1 = vector.load %arg2[%c0_1, %c0_2] : memref<1x32xf32, #tpu.memory_space<vmem>>, vector<1x32xf32>
    %c0_3 = arith.constant 0 : index
    %c0_4 = arith.constant 0 : index
    %2 = vector.load %arg3[%c0_3, %c0_4] : memref<1x32xf32, #tpu.memory_space<vmem>>, vector<1x32xf32>
    %cst = arith.constant dense<0.000000e+00> : vector<16xf32>
    %3 = vector.multi_reduction <add>, %0, %cst [1] : vector<16x32xf32> to vector<16xf32>
    %4 = vector.shape_cast %3 : vector<16xf32> to vector<16x1xf32>
    %cst_5 = arith.constant 3.200000e+01 : f32
    %5 = vector.broadcast %cst_5 : f32 to vector<16x1xf32>
    %6 = arith.divf %4, %5 : vector<16x1xf32>
    %7 = vector.broadcast %6 : vector<16x1xf32> to vector<16x32xf32>
    %8 = arith.subf %0, %7 : vector<16x32xf32>
    %9 = arith.mulf %8, %8 : vector<16x32xf32>
    %cst_6 = arith.constant dense<0.000000e+00> : vector<16xf32>
    %10 = vector.multi_reduction <add>, %9, %cst_6 [1] : vector<16x32xf32> to vector<16xf32>
    %11 = vector.shape_cast %10 : vector<16xf32> to vector<16x1xf32>
    %cst_7 = arith.constant 3.200000e+01 : f32
    %12 = vector.broadcast %cst_7 : f32 to vector<16x1xf32>
    %13 = arith.divf %11, %12 : vector<16x1xf32>
    %14 = vector.broadcast %6 : vector<16x1xf32> to vector<16x32xf32>
    %15 = arith.subf %0, %14 : vector<16x32xf32>
    %cst_8 = arith.constant 9.99999974E-6 : f32
    %16 = vector.broadcast %cst_8 : f32 to vector<16x1xf32>
    %17 = arith.addf %13, %16 : vector<16x1xf32>
    %18 = math.rsqrt %17 : vector<16x1xf32>
    %19 = vector.broadcast %18 : vector<16x1xf32> to vector<16x32xf32>
    %20 = arith.mulf %15, %19 : vector<16x32xf32>
    %21 = vector.broadcast %1 : vector<1x32xf32> to vector<16x32xf32>
    %22 = arith.mulf %20, %21 : vector<16x32xf32>
    %23 = vector.broadcast %2 : vector<1x32xf32> to vector<16x32xf32>
    %24 = arith.addf %22, %23 : vector<16x32xf32>
    %25 = arith.truncf %24 : vector<16x32xf32> to vector<16x32xbf16>
    %c0_9 = arith.constant 0 : index
    %c0_10 = arith.constant 0 : index
    %26 = vector.load %arg4[%c0_9, %c0_10] : memref<32x128xbf16, #tpu.memory_space<vmem>>, vector<32x128xbf16>
    %cst_11 = arith.constant dense<0.000000e+00> : vector<16x128xf32>
    %27 = tpu.matmul %25, %26, %cst_11 {dimension_numbers = #tpu.dot_dimension_numbers<[1], [0], [0], [1], [0, 0, 1, 1], [], []>} : vector<16x32xbf16>, vector<32x128xbf16>, vector<16x128xf32> -> vector<16x128xf32>
    %c0_12 = arith.constant 0 : index
    %c0_13 = arith.constant 0 : index
    %28 = vector.load %arg5[%c0_12, %c0_13] : memref<1x128xf32, #tpu.memory_space<vmem>>, vector<1x128xf32>
    %29 = vector.broadcast %28 : vector<1x128xf32> to vector<16x128xf32>
    %30 = arith.addf %27, %29 : vector<16x128xf32>
    %cst_14 = arith.constant 1.702000e+00 : f32
    %31 = vector.broadcast %cst_14 : f32 to vector<16x128xf32>
    %32 = arith.mulf %31, %30 : vector<16x128xf32>
    %33 = arith.negf %32 : vector<16x128xf32>
    %34 = math.exp %33 : vector<16x128xf32>
    %cst_15 = arith.constant 1.000000e+00 : f32
    %35 = vector.broadcast %cst_15 : f32 to vector<16x128xf32>
    %36 = arith.addf %35, %34 : vector<16x128xf32>
    %37 = arith.divf %35, %36 : vector<16x128xf32>
    %38 = arith.mulf %30, %37 : vector<16x128xf32>
    %39 = arith.truncf %38 : vector<16x128xf32> to vector<16x128xbf16>
    %c0_16 = arith.constant 0 : index
    %c0_17 = arith.constant 0 : index
    %40 = vector.load %arg6[%c0_16, %c0_17] : memref<128x32xbf16, #tpu.memory_space<vmem>>, vector<128x32xbf16>
    %cst_18 = arith.constant dense<0.000000e+00> : vector<16x32xf32>
    %41 = tpu.matmul %39, %40, %cst_18 {dimension_numbers = #tpu.dot_dimension_numbers<[1], [0], [0], [1], [0, 0, 1, 1], [], []>} : vector<16x128xbf16>, vector<128x32xbf16>, vector<16x32xf32> -> vector<16x32xf32>
    %c0_19 = arith.constant 0 : index
    %c0_20 = arith.constant 0 : index
    %42 = vector.load %arg7[%c0_19, %c0_20] : memref<1x32xf32, #tpu.memory_space<vmem>>, vector<1x32xf32>
    %43 = vector.broadcast %42 : vector<1x32xf32> to vector<16x32xf32>
    %44 = arith.addf %41, %43 : vector<16x32xf32>
    %45 = arith.addf %0, %44 : vector<16x32xf32>
    %c0_21 = arith.constant 0 : index
    %c0_22 = arith.constant 0 : index
    %46 = vector.load %arg8[%c0_21, %c0_22] : memref<16x32xf32, #tpu.memory_space<vmem>>, vector<16x32xf32>
    tpu.vector_store %arg8[%c0_21, %c0_22], %45 {strides = array<i32>} : memref<16x32xf32, #tpu.memory_space<vmem>>, vector<16x32xf32>,
    return
  }
  func.func @transform_0(%arg0: i32) -> (i32, i32) {
    %c0_i32 = arith.constant 0 : i32
    %c0_i32_0 = arith.constant 0 : i32
    return %arg0, %c0_i32 : i32, i32
  }
  func.func @transform_1(%arg0: i32) -> (i32, i32) {
    %c0_i32 = arith.constant 0 : i32
    %c0_i32_0 = arith.constant 0 : i32
    %c0_i32_1 = arith.constant 0 : i32
    return %c0_i32, %c0_i32_0 : i32, i32
  }
  func.func @transform_2(%arg0: i32) -> (i32, i32) {
    %c0_i32 = arith.constant 0 : i32
    %c0_i32_0 = arith.constant 0 : i32
    %c0_i32_1 = arith.constant 0 : i32
    return %c0_i32, %c0_i32_0 : i32, i32
  }
  func.func @transform_3(%arg0: i32) -> (i32, i32) {
    %c0_i32 = arith.constant 0 : i32
    %c0_i32_0 = arith.constant 0 : i32
    %c0_i32_1 = arith.constant 0 : i32
    return %c0_i32, %c0_i32_0 : i32, i32
  }
  func.func @transform_4(%arg0: i32) -> (i32, i32) {
    %c0_i32 = arith.constant 0 : i32
    %c0_i32_0 = arith.constant 0 : i32
    %c0_i32_1 = arith.constant 0 : i32
    return %c0_i32, %c0_i32_0 : i32, i32
  }
  func.func @transform_5(%arg0: i32) -> (i32, i32) {
    %c0_i32 = arith.constant 0 : i32
    %c0_i32_0 = arith.constant 0 : i32
    %c0_i32_1 = arith.constant 0 : i32
    return %c0_i32, %c0_i32_0 : i32, i32
  }
  func.func @transform_6(%arg0: i32) -> (i32, i32) {
    %c0_i32 = arith.constant 0 : i32
    %c0_i32_0 = arith.constant 0 : i32
    %c0_i32_1 = arith.constant 0 : i32
    return %c0_i32, %c0_i32_0 : i32, i32
  }
  func.func @transform_7(%arg0: i32) -> (i32, i32) {
    %c0_i32 = arith.constant 0 : i32
    %c0_i32_0 = arith.constant 0 : i32
    return %arg0, %c0_i32 : i32, i32
  }
}

module attributes {stable_mosaic.version = 11 : i64} {
  func.func @_ln_proj_kernel(%arg0: i32, %arg1: memref<8x32xf32, #tpu.memory_space<vmem>>, %arg2: memref<1x32xf32, #tpu.memory_space<vmem>>, %arg3: memref<1x32xf32, #tpu.memory_space<vmem>>, %arg4: memref<32x32xbf16, #tpu.memory_space<vmem>>, %arg5: memref<8x32xf32, #tpu.memory_space<vmem>>) attributes {dimension_semantics = [#tpu.dimension_semantics<parallel>], iteration_bounds = array<i64: 1>, scalar_prefetch = 0 : i64, scratch_operands = 0 : i64, tpu.core_type = #tpu.core_type<tc>, window_params = [{transform_indices = @transform_0, window_bounds = array<i64: 8, 32>}, {pipeline_mode = #tpu.pipeline_mode<synchronous>, transform_indices = @transform_1, window_bounds = array<i64: 1, 32>}, {pipeline_mode = #tpu.pipeline_mode<synchronous>, transform_indices = @transform_2, window_bounds = array<i64: 1, 32>}, {pipeline_mode = #tpu.pipeline_mode<synchronous>, transform_indices = @transform_3, window_bounds = array<i64: 32, 32>}, {transform_indices = @transform_4, window_bounds = array<i64: 8, 32>}]} {
    %c0 = arith.constant 0 : index
    %c0_0 = arith.constant 0 : index
    %0 = vector.load %arg1[%c0, %c0_0] : memref<8x32xf32, #tpu.memory_space<vmem>>, vector<8x32xf32>
    %c0_1 = arith.constant 0 : index
    %c0_2 = arith.constant 0 : index
    %1 = vector.load %arg2[%c0_1, %c0_2] : memref<1x32xf32, #tpu.memory_space<vmem>>, vector<1x32xf32>
    %c0_3 = arith.constant 0 : index
    %c0_4 = arith.constant 0 : index
    %2 = vector.load %arg3[%c0_3, %c0_4] : memref<1x32xf32, #tpu.memory_space<vmem>>, vector<1x32xf32>
    %cst = arith.constant dense<0.000000e+00> : vector<8xf32>
    %3 = vector.multi_reduction <add>, %0, %cst [1] : vector<8x32xf32> to vector<8xf32>
    %4 = vector.shape_cast %3 : vector<8xf32> to vector<8x1xf32>
    %cst_5 = arith.constant 3.200000e+01 : f32
    %5 = vector.broadcast %cst_5 : f32 to vector<8x1xf32>
    %6 = arith.divf %4, %5 : vector<8x1xf32>
    %7 = vector.broadcast %6 : vector<8x1xf32> to vector<8x32xf32>
    %8 = arith.subf %0, %7 : vector<8x32xf32>
    %9 = arith.mulf %8, %8 : vector<8x32xf32>
    %cst_6 = arith.constant dense<0.000000e+00> : vector<8xf32>
    %10 = vector.multi_reduction <add>, %9, %cst_6 [1] : vector<8x32xf32> to vector<8xf32>
    %11 = vector.shape_cast %10 : vector<8xf32> to vector<8x1xf32>
    %cst_7 = arith.constant 3.200000e+01 : f32
    %12 = vector.broadcast %cst_7 : f32 to vector<8x1xf32>
    %13 = arith.divf %11, %12 : vector<8x1xf32>
    %14 = vector.broadcast %6 : vector<8x1xf32> to vector<8x32xf32>
    %15 = arith.subf %0, %14 : vector<8x32xf32>
    %cst_8 = arith.constant 9.99999974E-6 : f32
    %16 = vector.broadcast %cst_8 : f32 to vector<8x1xf32>
    %17 = arith.addf %13, %16 : vector<8x1xf32>
    %18 = math.rsqrt %17 : vector<8x1xf32>
    %19 = vector.broadcast %18 : vector<8x1xf32> to vector<8x32xf32>
    %20 = arith.mulf %15, %19 : vector<8x32xf32>
    %21 = vector.broadcast %1 : vector<1x32xf32> to vector<8x32xf32>
    %22 = arith.mulf %20, %21 : vector<8x32xf32>
    %23 = vector.broadcast %2 : vector<1x32xf32> to vector<8x32xf32>
    %24 = arith.addf %22, %23 : vector<8x32xf32>
    %25 = arith.truncf %24 : vector<8x32xf32> to vector<8x32xbf16>
    %c0_9 = arith.constant 0 : index
    %c0_10 = arith.constant 0 : index
    %26 = vector.load %arg4[%c0_9, %c0_10] : memref<32x32xbf16, #tpu.memory_space<vmem>>, vector<32x32xbf16>
    %cst_11 = arith.constant dense<0.000000e+00> : vector<8x32xf32>
    %27 = tpu.matmul %25, %26, %cst_11 {dimension_numbers = #tpu.dot_dimension_numbers<[1], [0], [0], [1], [0, 0, 1, 1], [], []>} : vector<8x32xbf16>, vector<32x32xbf16>, vector<8x32xf32> -> vector<8x32xf32>
    %c0_12 = arith.constant 0 : index
    %c0_13 = arith.constant 0 : index
    %28 = vector.load %arg5[%c0_12, %c0_13] : memref<8x32xf32, #tpu.memory_space<vmem>>, vector<8x32xf32>
    tpu.vector_store %arg5[%c0_12, %c0_13], %27 {strides = array<i32>} : memref<8x32xf32, #tpu.memory_space<vmem>>, vector<8x32xf32>,
    return
  }
  func.func @transform_0(%arg0: i32) -> (i32, i32) {
    %c0_i32 = arith.constant 0 : i32
    %c0_i32_0 = arith.constant 0 : i32
    return %arg0, %c0_i32 : i32, i32
  }
  func.func @transform_1(%arg0: i32) -> (i32, i32) {
    %c0_i32 = arith.constant 0 : i32
    %c0_i32_0 = arith.constant 0 : i32
    %c0_i32_1 = arith.constant 0 : i32
    return %c0_i32, %c0_i32_0 : i32, i32
  }
  func.func @transform_2(%arg0: i32) -> (i32, i32) {
    %c0_i32 = arith.constant 0 : i32
    %c0_i32_0 = arith.constant 0 : i32
    %c0_i32_1 = arith.constant 0 : i32
    return %c0_i32, %c0_i32_0 : i32, i32
  }
  func.func @transform_3(%arg0: i32) -> (i32, i32) {
    %c0_i32 = arith.constant 0 : i32
    %c0_i32_0 = arith.constant 0 : i32
    %c0_i32_1 = arith.constant 0 : i32
    return %c0_i32, %c0_i32_0 : i32, i32
  }
  func.func @transform_4(%arg0: i32) -> (i32, i32) {
    %c0_i32 = arith.constant 0 : i32
    %c0_i32_0 = arith.constant 0 : i32
    return %arg0, %c0_i32 : i32, i32
  }
}

</mosaic_0001>

<llo_original>
// kernel: tpu_custom_call.1
$region0: #{tpu_custom_call.1}
  #allocation0 [shape = 'u32[]', space=smem, size = 0x4, offset = 0x4, fixed_abs, tag = 'smem constant byte address 0x4 - core index']
  #allocation1 [shape = 'u32[72,128]{1,0:T(1,128)}', space=vmem, size = 0x9000, scoped, tag = 'internal scratch']
  %s0 = inlined_call_operand.hbm [shape: f32[32,128], index: 0, kind: input, shape index: {}]
  %s1 = inlined_call_operand.hbm [shape: f32[8,128], index: 1, kind: input, shape index: {}]
  %s2 = inlined_call_operand.hbm [shape: f32[32,128], index: 2, kind: output, shape index: {}]
  %s3 = sld [smem:[#allocation0]]
  $region49: #{tpu_custom_call.1} parent=0
    _
  %s5 = ssub.s32 1, %s3
  %s6 = scalar_select 0, %s5, %s3
  $region1: #{tpu_custom_call.1} parent=0
    #allocation2 [shape = 'u8[8192]{0}', space=vmem, size = 0x2000, scoped, tag = 'input window, operand 0']
    #allocation3 [shape = 's32[2]{0}', space=sflag, size = 0x8, scoped, tag = 'scoped memory for tpu_custom_call.1']
    #allocation4 [shape = 's32[2]{0}', space=sflag, size = 0x8, scoped, tag = 'scoped memory for tpu_custom_call.1']
    #allocation5 [shape = 'u8[4096]{0}', space=vmem, size = 0x1000, scoped, tag = 'input window, operand 1, single buffered']
    #allocation6 [shape = 's32[1]{0}', space=sflag, size = 0x4, scoped, tag = 'scoped memory for tpu_custom_call.1']
    #allocation7 [shape = 'u8[8192]{0}', space=vmem, size = 0x2000, scoped, tag = 'output window, operand 0']
    %7 = vsyncpa [#allocation3], 0
    %s8 = scalar_lea.sflag [#allocation3], 1
    %9 = vsyncpa %s8, 0
    %10 = vsyncpa [#allocation6], 0
    %11 = vsyncpa [#allocation4], 0
    %s12 = scalar_lea.sflag [#allocation4], 1
    %13 = vsyncpa %s12, 0
    loop: start=0, step=1, limit=6
    $region2: #{tpu_custom_call.1} parent=1 // loop_pre_header
      _
    $region3: #{tpu_custom_call.1} parent=1 // loop_header
      %s15 = sphi 0, %s19
      %p16 = scmp.ge.s32.totalorder %s15, 6
      %s25 = sphi 0, %s27
      %s28 = sphi 0, %s25
      %s29 = sphi 0, %s28
      %s45 = sphi 0, %s29
      %s49 = sphi 0, %s49
      %s51 = sphi 0, %s49
      %s52 = sphi 0, %s51
      %s66 = sphi 0, %s52
      %s72 = sphi 0, %s74
      %s75 = sphi 0, %s72
      %s76 = sphi 0, %s75
      %s92 = sphi 0, %s76
    $region4: #{tpu_custom_call.1} parent=1 // loop_header_branch
      %18 = sbr.rel (%p16) target = $region8
    $region5: #{tpu_custom_call.1} parent=1 // loop_body
      %s20 = ssub.s32 %s15, 1
      %s21 = ssub.s32 %s15, 2
      %s22 = sadd.s32 %s15, 1
      %s23 = ssub.s32 %s15, %s22
      %p24 = scmp.eq.s32.totalorder %s23, 0
      %s26 = sadd.s32 %s25, 1
      %s27 = scalar_select %p24, %s25, %s26
      %p30 = pneg %p24
      %p31 = scmp.eq.s32.totalorder %s15, 3
      %p32 = por %p30, %p31
      %p33 = scmp.ne.s32.totalorder %s25, %s28
      %p34 = scmp.eq.s32.totalorder %s15, 0
      %p35 = por %p33, %p34
      %p36 = scmp.ne.s32.totalorder %s25, %s28
      %p37 = scmp.eq.s32.totalorder %s20, 3
      %p38 = por %p36, %p37
      %p39 = scmp.ne.s32.totalorder %s28, %s29
      %p40 = scmp.eq.s32.totalorder %s20, 0
      %p41 = por %p39, %p40
      %p42 = scmp.ne.s32.totalorder %s28, %s29
      %p43 = scmp.eq.s32.totalorder %s21, 3
      %p44 = por %p42, %p43
      %p46 = scmp.ne.s32.totalorder %s29, %s45
      %p47 = scmp.eq.s32.totalorder %s21, 0
      %p48 = por %p46, %p47
      %s50 = sadd.s32 %s49, 1
      %p53 = scmp.eq.s32.totalorder %s15, 3
      %p54 = scmp.ne.s32.totalorder %s49, %s51
      %p55 = scmp.eq.s32.totalorder %s15, 0
      %p56 = por %p54, %p55
      %p57 = scmp.ne.s32.totalorder %s49, %s51
      %p58 = scmp.eq.s32.totalorder %s20, 3
      %p59 = por %p57, %p58
      %p60 = scmp.ne.s32.totalorder %s51, %s52
      %p61 = scmp.eq.s32.totalorder %s20, 0
      %p62 = por %p60, %p61
      %p63 = scmp.ne.s32.totalorder %s51, %s52
      %p64 = scmp.eq.s32.totalorder %s21, 3
      %p65 = por %p63, %p64
      %p67 = scmp.ne.s32.totalorder %s52, %s66
      %p68 = scmp.eq.s32.totalorder %s21, 0
      %p69 = por %p67, %p68
      %s70 = ssub.s32 %s15, %s22
      %p71 = scmp.eq.s32.totalorder %s70, 0
      %s73 = sadd.s32 %s72, 1
      %s74 = scalar_select %p71, %s72, %s73
      %p77 = pneg %p71
      %p78 = scmp.eq.s32.totalorder %s15, 3
      %p79 = por %p77, %p78
      %p80 = scmp.ne.s32.totalorder %s72, %s75
      %p81 = scmp.eq.s32.totalorder %s15, 0
      %p82 = por %p80, %p81
      %p83 = scmp.ne.s32.totalorder %s72, %s75
      %p84 = scmp.eq.s32.totalorder %s20, 3
      %p85 = por %p83, %p84
      %p86 = scmp.ne.s32.totalorder %s75, %s76
      %p87 = scmp.eq.s32.totalorder %s20, 0
      %p88 = por %p86, %p87
      %p89 = scmp.ne.s32.totalorder %s75, %s76
      %p90 = scmp.eq.s32.totalorder %s21, 3
      %p91 = por %p89, %p90
      %p93 = scmp.ne.s32.totalorder %s76, %s92
      %p94 = scmp.eq.s32.totalorder %s21, 0
      %p95 = por %p93, %p94
      %p96 = scmp.le.s32.totalorder 1, %s15
      %p97 = scmp.lt.s32.totalorder %s15, 5
      %p98 = pnand %p96, %p97
      %p99 = pneg %p98
      // Predicated region
      $region9: #{tpu_custom_call.1} parent=5 // pred_check
        _
      $region10: #{tpu_custom_call.1} parent=5 // pred_check_branch
        %101 = sbr.rel (%p98) target = $region12
      $region11: #{tpu_custom_call.1} parent=5 // pred_region
        %s102 = ssub.s32 %s15, 1
        // Predicated region
        $region13: #{tpu_custom_call.1} parent=11 // pred_check
          %p103 = pneg %p62
        $region14: #{tpu_custom_call.1} parent=11 // pred_check_branch
          %105 = sbr.rel (%p103) target = $region16
        $region15: #{tpu_custom_call.1} parent=11 // pred_region
          %107 = vsyncadd [#allocation6], 0
          %s109 = sshll.u32 %s1, 4
          %s110 = int_to_ptr.hbm [resolvable:$true] %s109
          %s111 = sshll.u32 [#allocation5], 4
          %s112 = int_to_ptr.vmem [resolvable:$true] %s111
          %114 = dma.hbm_to_vmem [thread:$0]  %s110, 128, %s112, [#allocation6]
        $region16: #{tpu_custom_call.1} parent=11 // pred_fallthru
          _
      $region12: #{tpu_custom_call.1} parent=5 // pred_fallthru
        _
      %p115 = scmp.lt.s32.totalorder %s15, 4
      // Predicated region
      $region17: #{tpu_custom_call.1} parent=5 // pred_check
        %p116 = pneg %p115
      $region18: #{tpu_custom_call.1} parent=5 // pred_check_branch
        %118 = sbr.rel (%p116) target = $region20
      $region19: #{tpu_custom_call.1} parent=5 // pred_region
        // Predicated region
        $region21: #{tpu_custom_call.1} parent=19 // pred_check
          %p119 = pneg %p35
        $region22: #{tpu_custom_call.1} parent=19 // pred_check_branch
          %121 = sbr.rel (%p119) target = $region24
        $region23: #{tpu_custom_call.1} parent=19 // pred_region
          %s122 = sand.u32 %s25, 1
          %s123 = scalar_lea.sflag [#allocation3], %s122
          %s124 = sand.u32 %s25, 1
          %s125 = smul.addr %s124, 8
          %s126 = scalar_lea.vmem [#allocation2], %s125
          %128 = vsyncadd %s123, 0
          %s129 = smul.addr %s15, 8
          %s130 = scalar_lea.hbm %s0, %s129
          %s132 = sshll.u32 %s130, 4
          %s133 = int_to_ptr.hbm [resolvable:$true] %s132
          %s134 = sshll.u32 %s126, 4
          %s135 = int_to_ptr.vmem [resolvable:$true] %s134
          %137 = dma.hbm_to_vmem [thread:$0]  %s133, 128, %s135, %s123
        $region24: #{tpu_custom_call.1} parent=19 // pred_fallthru
          _
      $region20: #{tpu_custom_call.1} parent=5 // pred_fallthru
        _
      %p138 = scmp.le.s32.totalorder 1, %s15
      %p139 = scmp.lt.s32.totalorder %s15, 5
      %p140 = pnand %p138, %p139
      %p141 = pneg %p140
      // Predicated region
      $region25: #{tpu_custom_call.1} parent=5 // pred_check
        _
      $region26: #{tpu_custom_call.1} parent=5 // pred_check_branch
        %143 = sbr.rel (%p140) target = $region28
      $region27: #{tpu_custom_call.1} parent=5 // pred_region
        %s144 = ssub.s32 %s15, 1
        %s145 = sand.u32 %s28, 1
        %s146 = scalar_lea.sflag [#allocation3], %s145
        %s147 = sand.u32 %s28, 1
        %s148 = smul.addr %s147, 8
        %s149 = scalar_lea.vmem [#allocation2], %s148
        // Predicated region
        $region29: #{tpu_custom_call.1} parent=27 // pred_check
          %p150 = pneg %p41
        $region30: #{tpu_custom_call.1} parent=27 // pred_check_branch
          %152 = sbr.rel (%p150) target = $region32
        $region31: #{tpu_custom_call.1} parent=27 // pred_region
          %154 = dma.done %s146, 128
        $region32: #{tpu_custom_call.1} parent=27 // pred_fallthru
          _
        // Predicated region
        $region33: #{tpu_custom_call.1} parent=27 // pred_check
          %p155 = pneg %p62
        $region34: #{tpu_custom_call.1} parent=27 // pred_check_branch
          %157 = sbr.rel (%p155) target = $region36
        $region35: #{tpu_custom_call.1} parent=27 // pred_region
          %159 = dma.done [#allocation6], 128
        $region36: #{tpu_custom_call.1} parent=27 // pred_fallthru
          _
        %s160 = sand.u32 %s28, 1
        %s161 = scalar_lea.sflag [#allocation3], %s160
        %s162 = sand.u32 %s28, 1
        %s163 = smul.addr %s162, 8
        %s164 = scalar_lea.vmem [#allocation2], %s163
        %p165 = pneg %p41
        %p166 = pneg %p38
        %p167 = pneg %p62
        %p168 = pneg %p59
        %p169 = pneg %p88
        %p170 = pneg %p85
        %s171 = sand.u32 %s75, 1
        %s172 = scalar_lea.sflag [#allocation4], %s171
        %s173 = sand.u32 %s75, 1
        %s174 = smul.addr %s173, 8
        %s175 = scalar_lea.vmem [#allocation7], %s174
        %v176 = vld [vmem:[%s149] sm:$0xff]
        %v177 = vld [vmem:[#allocation5] sm:$0xff]
        %v178 = vadd.f32 %v176, %v177
        %179 = vst [vmem:[%s175] sm:$0xff] %v178
        %s180 = sand.u32 %s75, 1
        %s181 = scalar_lea.sflag [#allocation4], %s180
        %s182 = sand.u32 %s75, 1
        %s183 = smul.addr %s182, 8
        %s184 = scalar_lea.vmem [#allocation7], %s183
        // Predicated region
        $region37: #{tpu_custom_call.1} parent=27 // pred_check
          %p185 = pneg %p85
        $region38: #{tpu_custom_call.1} parent=27 // pred_check_branch
          %187 = sbr.rel (%p185) target = $region40
        $region39: #{tpu_custom_call.1} parent=27 // pred_region
          %189 = vsyncadd %s181, 0
          %s190 = smul.addr %s20, 8
          %s191 = scalar_lea.hbm %s2, %s190
          %s193 = sshll.u32 %s184, 4
          %s194 = int_to_ptr.vmem [resolvable:$true] %s193
          %s195 = sshll.u32 %s191, 4
          %s196 = int_to_ptr.hbm [resolvable:$true] %s195
          %198 = dma.vmem_to_hbm [thread:$0]  %s194, 128, %s196, %s181
        $region40: #{tpu_custom_call.1} parent=27 // pred_fallthru
          _
      $region28: #{tpu_custom_call.1} parent=5 // pred_fallthru
        _
      %p199 = scmp.le.s32.totalorder 2, %s15
      // Predicated region
      $region41: #{tpu_custom_call.1} parent=5 // pred_check
        %p200 = pneg %p199
      $region42: #{tpu_custom_call.1} parent=5 // pred_check_branch
        %202 = sbr.rel (%p200) target = $region44
      $region43: #{tpu_custom_call.1} parent=5 // pred_region
        %s203 = ssub.s32 %s15, 2
        // Predicated region
        $region45: #{tpu_custom_call.1} parent=43 // pred_check
          %p204 = pneg %p91
        $region46: #{tpu_custom_call.1} parent=43 // pred_check_branch
          %206 = sbr.rel (%p204) target = $region48
        $region47: #{tpu_custom_call.1} parent=43 // pred_region
          %s207 = sand.u32 %s76, 1
          %s208 = scalar_lea.sflag [#allocation4], %s207
          %s209 = sand.u32 %s76, 1
          %s210 = smul.addr %s209, 8
          %s211 = scalar_lea.vmem [#allocation7], %s210
          %213 = dma.done %s208, 128
        $region48: #{tpu_custom_call.1} parent=43 // pred_fallthru
          _
      $region44: #{tpu_custom_call.1} parent=5 // pred_fallthru
        _
    $region6: #{tpu_custom_call.1} parent=1 // loop_footer
      %s19 = sadd.s32 1, %s15
    $region7: #{tpu_custom_call.1} parent=1 // loop_footer_branch
      %14 = sbr.rel target = $region3
    $region8: #{tpu_custom_call.1} parent=1 // loop_exit
      _
    %214 = vsyncpa [#allocation3], 1
    %s215 = scalar_lea.sflag [#allocation3], 1
    %216 = vsyncpa %s215, 1
    %217 = vsyncpa [#allocation6], 1
    %218 = vsyncpa [#allocation4], 1
    %s219 = scalar_lea.sflag [#allocation4], 1
    %220 = vsyncpa %s219, 1

// kernel: text_encoder_forward.7
$region0: #{text_encoder_forward.7}
  #allocation0 [shape = 'u32[]', space=smem, size = 0x4, offset = 0x4, fixed_abs, tag = 'smem constant byte address 0x4 - core index']
  #allocation1 [shape = 'u32[72,128]{1,0:T(1,128)}', space=vmem, size = 0x9000, scoped, tag = 'internal scratch']
  %s0 = inlined_call_operand.vmem [shape: f32[16,32], index: 0, kind: input, shape index: {}]
  %s1 = inlined_call_operand.vmem [shape: f32[1,32], index: 1, kind: input, shape index: {}]
  %s2 = inlined_call_operand.vmem [shape: f32[1,32], index: 2, kind: input, shape index: {}]
  %s3 = inlined_call_operand.vmem [shape: bf16[32,96], index: 3, kind: input, shape index: {}]
  %s4 = inlined_call_operand.vmem [shape: f32[1,96], index: 4, kind: input, shape index: {}]
  %s5 = inlined_call_operand.vmem [shape: bf16[16,96], index: 5, kind: output, shape index: {}]
  %s6 = sld [smem:[#allocation0]]
  $region30: #{text_encoder_forward.7} parent=0
    _
  %s8 = ssub.s32 1, %s6
  %s9 = scalar_select 0, %s8, %s6
  // Predicated region
  $region2: #{text_encoder_forward.7} parent=0 // pred_check
    _
  $region3: #{text_encoder_forward.7} parent=0 // pred_check_branch
    %11 = sbr.rel (0) target = $region5
  $region4: #{text_encoder_forward.7} parent=0 // pred_region
    _
  $region5: #{text_encoder_forward.7} parent=0 // pred_fallthru
    _
  // Predicated region
  $region6: #{text_encoder_forward.7} parent=0 // pred_check
    _
  $region7: #{text_encoder_forward.7} parent=0 // pred_check_branch
    %13 = sbr.rel (0) target = $region9
  $region8: #{text_encoder_forward.7} parent=0 // pred_region
    _
  $region9: #{text_encoder_forward.7} parent=0 // pred_fallthru
    _
  // Predicated region
  $region10: #{text_encoder_forward.7} parent=0 // pred_check
    _
  $region11: #{text_encoder_forward.7} parent=0 // pred_check_branch
    %15 = sbr.rel (0) target = $region13
  $region12: #{text_encoder_forward.7} parent=0 // pred_region
    _
  $region13: #{text_encoder_forward.7} parent=0 // pred_fallthru
    _
  // Predicated region
  $region14: #{text_encoder_forward.7} parent=0 // pred_check
    _
  $region15: #{text_encoder_forward.7} parent=0 // pred_check_branch
    %17 = sbr.rel (0) target = $region17
  $region16: #{text_encoder_forward.7} parent=0 // pred_region
    _
  $region17: #{text_encoder_forward.7} parent=0 // pred_fallthru
    _
  // Predicated region
  $region18: #{text_encoder_forward.7} parent=0 // pred_check
    _
  $region19: #{text_encoder_forward.7} parent=0 // pred_check_branch
    %19 = sbr.rel (0) target = $region21
  $region20: #{text_encoder_forward.7} parent=0 // pred_region
    _
  $region21: #{text_encoder_forward.7} parent=0 // pred_fallthru
    _
  %v21 = vld [vmem:[%s0] sm:$0xff]
  %v22 = vld [vmem:[%s0 + $0x8] sm:$0xff]
  %v23 = vld [vmem:[%s1] sm:$0x1]
  %v24 = vld [vmem:[%s2] sm:$0x1]
  %vm25 = vcmask 261120
  %v26 = vsel %vm25, %v21, 0.0
  %27 = vadd.xlane.f32.xlu0 %v26
  %v28 = vpop.xlane.xlu0 %27
  %v29 = vsel %vm25, %v22, 0.0
  %30 = vadd.xlane.f32.xlu0 %v29
  %v31 = vpop.xlane.xlu0 %30
  %v32 = vrcp.pop 32.0
  %v33 = vmul.f32 32.0, %v32
  %v34 = vsub.f32 1.0, %v33
  %v35 = vmul.f32 %v32, %v34
  %v36 = vadd.f32 %v32, %v35
  %vm37 = vweird.f32 %v32
  %v38 = vsel %vm37, %v32, %v36
  %v39 = vmul.f32 %v28, %v38
  %v40 = vmul.f32 %v31, %v38
  %v41 = vsub.f32 %v21, %v39
  %v42 = vsub.f32 %v22, %v40
  %v43 = vmul.f32 %v41, %v41
  %v44 = vmul.f32 %v42, %v42
  %v45 = vsel %vm25, %v43, 0.0
  %46 = vadd.xlane.f32.xlu0 %v45
  %v47 = vpop.xlane.xlu0 %46
  %v48 = vsel %vm25, %v44, 0.0
  %49 = vadd.xlane.f32.xlu0 %v48
  %v50 = vpop.xlane.xlu0 %49
  %v51 = vmul.f32 %v47, %v38
  %v52 = vmul.f32 %v50, %v38
  %v53 = vadd.f32 %v51, 1e-05
  %v54 = vadd.f32 %v52, 1e-05
  %v55 = vrsqrt.pop %v53
  %v56 = vmul.f32 %v55, %v53
  %v57 = vmul.f32 %v56, %v55
  %v58 = vmul.f32 0.5, %v57
  %v59 = vsub.f32 1.5, %v58
  %v60 = vmul.f32 %v55, %v59
  %vm61 = vweird.f32 %v53
  %vm62 = vweird.f32 %v55
  %vm63 = vmor %vm61, %vm62
  %v64 = vsel %vm63, %v55, %v60
  %v65 = vrsqrt.pop %v54
  %v66 = vmul.f32 %v65, %v54
  %v67 = vmul.f32 %v66, %v65
  %v68 = vmul.f32 0.5, %v67
  %v69 = vsub.f32 1.5, %v68
  %v70 = vmul.f32 %v65, %v69
  %vm71 = vweird.f32 %v54
  %vm72 = vweird.f32 %v65
  %vm73 = vmor %vm71, %vm72
  %v74 = vsel %vm73, %v65, %v70
  %v75 = vmul.f32 %v41, %v64
  %v76 = vmul.f32 %v42, %v74
  %v78 = vperm.slane %v23, 0
  %v80 = vmul.f32 %v75, %v78
  %v81 = vmul.f32 %v76, %v78
  %v83 = vperm.slane %v24, 0
  %v85 = vadd.f32 %v80, %v83
  %v86 = vadd.f32 %v81, %v83
  %v87 = vpack.c.bf16 %v86, %v85
  %v88 = vld [vmem:[%s3] sm:$0xf]
  %v89 = vld [vmem:[%s3 + $0x4] sm:$0xf]
  %v90 = vld [vmem:[%s3 + $0x8] sm:$0xf]
  %v91 = vld [vmem:[%s3 + $0xc] sm:$0xf]
  %v92 = vld [vmem:[%s4] sm:$0x1]
  %v94 = vperm.slane %v92, 0
  %v100 = vunpack.c.l.b16 %v88
  %v101 = vunpack.c.l.b16 %v89
  %v102 = vunpack.c.l.b16 %v90
  %v103 = vunpack.c.l.b16 %v91
  %v104 = vpack.c.b16 %v101, %v100
  %v105 = vpack.c.b16 %v103, %v102
  %v109 = vsel %vm25, %v87, 0
  %111 = vmatpush.bf16.msra.mxu0 0
  %112 = vmatpush.bf16.msra.mxu0 0
  %113 = vmatpush.bf16.msra.mxu0 0
  %114 = vmatpush.bf16.msra.mxu0 0
  %115 = vmatpush.bf16.msra.mxu0 0
  %116 = vmatpush.bf16.msra.mxu0 0
  %117 = vmatpush.bf16.msra.mxu0 %v105
  %118 = vmatpush.bf16.msra.mxu0 %v104
  %119 = vmatmul.bf16.gmra.mxu0 %v109
  %v120 = vpop.f32.mrf.mxu0
  %v121 = vadd.f32 %v94, %v120
  %v122 = vpop.f32.mrf.mxu0
  %v123 = vadd.f32 %v94, %v122
  %124 = vdwg.mxu0
  %v125 = vpack.c.bf16 %v121, %v121
  %v126 = vpack.c.bf16 %v123, %v123
  %vm127 = vcmask 781312
  %128 = vst.msk [vmem:[%s5] sm:$0xf] %vm127, %v125
  %129 = vst.msk [vmem:[%s5 + $0x4] sm:$0xf] %vm127, %v126
  // Predicated region
  $region22: #{text_encoder_forward.7} parent=0 // pred_check
    _
  $region23: #{text_encoder_forward.7} parent=0 // pred_check_branch
    %131 = sbr.rel (0) target = $region25
  $region24: #{text_encoder_forward.7} parent=0 // pred_region
    _
  $region25: #{text_encoder_forward.7} parent=0 // pred_fallthru
    _
  // Predicated region
  $region26: #{text_encoder_forward.7} parent=0 // pred_check
    _
  $region27: #{text_encoder_forward.7} parent=0 // pred_check_branch
    %133 = sbr.rel (0) target = $region29
  $region28: #{text_encoder_forward.7} parent=0 // pred_region
    _
  $region29: #{text_encoder_forward.7} parent=0 // pred_fallthru
    _

// kernel: text_encoder_forward.8
$region0: #{text_encoder_forward.8}
  #allocation0 [shape = 'u32[]', space=smem, size = 0x4, offset = 0x4, fixed_abs, tag = 'smem constant byte address 0x4 - core index']
  #allocation1 [shape = 'u32[72,128]{1,0:T(1,128)}', space=vmem, size = 0x9000, scoped, tag = 'internal scratch']
  #allocation2 [shape = 'bf16[2,8,32]{2,1,0:T(8,128)(2,1)}', space=vmem, size = 0x1000, scoped, tag = 'scratch operand']
  %s0 = inlined_call_operand.vmem [shape: bf16[2,8,96], index: 0, kind: input, shape index: {}]
  %s1 = inlined_call_operand.vmem [shape: f32[2,8,32], index: 1, kind: input, shape index: {}]
  %s2 = inlined_call_operand.vmem [shape: bf16[32,32], index: 2, kind: input, shape index: {}]
  %s3 = inlined_call_operand.vmem [shape: f32[1,32], index: 3, kind: input, shape index: {}]
  %s4 = inlined_call_operand.vmem [shape: f32[2,8,32], index: 4, kind: output, shape index: {}]
  %s5 = sld [smem:[#allocation0]]
  $region26: #{text_encoder_forward.8} parent=0
    _
  %s7 = ssub.s32 1, %s5
  %s8 = scalar_select 0, %s7, %s5
  // Predicated region
  $region2: #{text_encoder_forward.8} parent=0 // pred_check
    _
  $region3: #{text_encoder_forward.8} parent=0 // pred_check_branch
    %10 = sbr.rel (0) target = $region5
  $region4: #{text_encoder_forward.8} parent=0 // pred_region
    _
  $region5: #{text_encoder_forward.8} parent=0 // pred_fallthru
    _
  // Predicated region
  $region6: #{text_encoder_forward.8} parent=0 // pred_check
    _
  $region7: #{text_encoder_forward.8} parent=0 // pred_check_branch
    %12 = sbr.rel (0) target = $region9
  $region8: #{text_encoder_forward.8} parent=0 // pred_region
    _
  $region9: #{text_encoder_forward.8} parent=0 // pred_fallthru
    _
  // Predicated region
  $region10: #{text_encoder_forward.8} parent=0 // pred_check
    _
  $region11: #{text_encoder_forward.8} parent=0 // pred_check_branch
    %14 = sbr.rel (0) target = $region13
  $region12: #{text_encoder_forward.8} parent=0 // pred_region
    _
  $region13: #{text_encoder_forward.8} parent=0 // pred_fallthru
    _
  // Predicated region
  $region14: #{text_encoder_forward.8} parent=0 // pred_check
    _
  $region15: #{text_encoder_forward.8} parent=0 // pred_check_branch
    %16 = sbr.rel (0) target = $region17
  $region16: #{text_encoder_forward.8} parent=0 // pred_region
    _
  $region17: #{text_encoder_forward.8} parent=0 // pred_fallthru
    _
  %v18 = vlaneseq
  %v19 = vshrl.u32 %v18, 7
  %v20 = vlaneseq
  %v21 = vand.u32 %v20, 127
  %vm22 = vcmp.le.s32.totalorder %v21, %v19
  %v23 = vld [vmem:[%s0] sm:$0xf]
  %v24 = vld [vmem:[%s0 + $0x4] sm:$0xf]
  %v26 = vunpack.c.l.b16 %v23
  %v27 = vpack.c.b16 %v26, %v26
  %28 = vrot.lane.b32.xlu0 %v27, 96
  %v29 = vpop.permute.xlu0 %28
  %vm30 = vcmask 64512
  %v32 = vsel %vm30, %v23, 0
  %v35 = vsel %vm30, %v29, 0
  %37 = vmatpush.bf16.xpose.msra.mxu0 0
  %38 = vmatpush.bf16.xpose.msra.mxu0 0
  %39 = vmatpush.bf16.xpose.msra.mxu0 0
  %40 = vmatpush.bf16.xpose.msra.mxu0 0
  %41 = vmatpush.bf16.xpose.msra.mxu0 0
  %42 = vmatpush.bf16.xpose.msra.mxu0 0
  %43 = vmatpush.bf16.xpose.msra.mxu0 0
  %44 = vmatpush.bf16.xpose.msra.mxu0 %v35
  %45 = vmatmul.bf16.gmra.mxu0 %v32
  %v46 = vpop.f32.mrf.mxu0
  %v47 = vadd.f32 0.0, %v46
  %v48 = vpop.f32.mrf.mxu0
  %49 = vdwg.mxu0
  %v51 = vunpack.c.l.b16 %v24
  %v52 = vpack.c.b16 %v51, %v51
  %53 = vrot.lane.b32.xlu0 %v52, 96
  %v54 = vpop.permute.xlu0 %53
  %v56 = vsel %vm30, %v24, 0
  %v59 = vsel %vm30, %v54, 0
  %61 = vmatpush.bf16.xpose.msra.mxu0 0
  %62 = vmatpush.bf16.xpose.msra.mxu0 0
  %63 = vmatpush.bf16.xpose.msra.mxu0 0
  %64 = vmatpush.bf16.xpose.msra.mxu0 0
  %65 = vmatpush.bf16.xpose.msra.mxu0 0
  %66 = vmatpush.bf16.xpose.msra.mxu0 0
  %67 = vmatpush.bf16.xpose.msra.mxu0 0
  %68 = vmatpush.bf16.xpose.msra.mxu0 %v59
  %69 = vmatmul.bf16.gmra.mxu0 %v56
  %v70 = vpop.f32.mrf.mxu0
  %v71 = vadd.f32 0.0, %v70
  %v72 = vpop.f32.mrf.mxu0
  %73 = vdwg.mxu0
  %v74 = vmul.f32 %v47, 0.35355338
  %v75 = vmul.f32 %v71, 0.35355338
  %v76 = vsel %vm22, 1, 0
  %vm77 = vcmp.eq.s32.totalorder %v76, 1
  %v78 = vsel %vm77, %v74, -1e+09
  %v79 = vsel %vm77, %v75, -1e+09
  %v80 = vsel %vm30, %v78, -inf
  %81 = vmax.xlane.f32.xlu0 %v80
  %v82 = vpop.xlane.xlu0 %81
  %v83 = vsel %vm30, %v79, -inf
  %84 = vmax.xlane.f32.xlu0 %v83
  %v85 = vpop.xlane.xlu0 %84
  %v86 = vsub.f32 %v78, %v82
  %v87 = vsub.f32 %v79, %v85
  %v88 = vmul.f32 %v86, 1.442695
  %v89 = vpow.pop %v88
  %v90 = vmul.f32 %v87, 1.442695
  %v91 = vpow.pop %v90
  %v92 = vsel %vm30, %v89, 0.0
  %93 = vadd.xlane.f32.xlu0 %v92
  %v94 = vpop.xlane.xlu0 %93
  %v95 = vsel %vm30, %v91, 0.0
  %96 = vadd.xlane.f32.xlu0 %v95
  %v97 = vpop.xlane.xlu0 %96
  %v98 = vrcp.pop %v94
  %v99 = vrcp.pop %v97
  %v100 = vmul.f32 %v89, %v98
  %v101 = vmul.f32 %v91, %v99
  %v102 = vpack.c.bf16 %v100, %v100
  %v103 = vpack.c.bf16 %v101, %v101
  %104 = vrot.lane.b32.xlu0 %v27, 64
  %v105 = vpop.permute.xlu0 %104
  %v107 = vsel %vm30, %v102, 0
  %vm109 = vcmask 1043456
  %v111 = vsel %vm109, %v105, 0
  %113 = vmatpush.bf16.msra.mxu0 0
  %114 = vmatpush.bf16.msra.mxu0 0
  %115 = vmatpush.bf16.msra.mxu0 0
  %116 = vmatpush.bf16.msra.mxu0 0
  %117 = vmatpush.bf16.msra.mxu0 0
  %118 = vmatpush.bf16.msra.mxu0 0
  %119 = vmatpush.bf16.msra.mxu0 0
  %120 = vmatpush.bf16.msra.mxu0 %v111
  %121 = vmatmul.bf16.gmra.mxu0 %v107
  %v122 = vpop.f32.mrf.mxu0
  %v123 = vadd.f32 0.0, %v122
  %v124 = vpop.f32.mrf.mxu0
  %125 = vdwg.mxu0
  %126 = vrot.lane.b32.xlu0 %v52, 64
  %v127 = vpop.permute.xlu0 %126
  %v129 = vsel %vm30, %v103, 0
  %v132 = vsel %vm109, %v127, 0
  %134 = vmatpush.bf16.msra.mxu0 0
  %135 = vmatpush.bf16.msra.mxu0 0
  %136 = vmatpush.bf16.msra.mxu0 0
  %137 = vmatpush.bf16.msra.mxu0 0
  %138 = vmatpush.bf16.msra.mxu0 0
  %139 = vmatpush.bf16.msra.mxu0 0
  %140 = vmatpush.bf16.msra.mxu0 0
  %141 = vmatpush.bf16.msra.mxu0 %v132
  %142 = vmatmul.bf16.gmra.mxu0 %v129
  %v143 = vpop.f32.mrf.mxu0
  %v144 = vadd.f32 0.0, %v143
  %v145 = vpop.f32.mrf.mxu0
  %146 = vdwg.mxu0
  %v147 = vpack.c.bf16 %v123, %v123
  %v148 = vpack.c.bf16 %v144, %v144
  %vm149 = vcmask 60416
  %150 = vst.msk [vmem:[#allocation2] sm:$0xf] %vm149, %v147
  %151 = vst.msk [vmem:[#allocation2 + $0x4] sm:$0xf] %vm149, %v148
  %v152 = vld [vmem:[%s0] sm:$0xf]
  %v153 = vld [vmem:[%s0 + $0x4] sm:$0xf]
  %v155 = vunpack.c.l.b16 %v152
  %v156 = vpack.c.b16 %v155, %v155
  %157 = vrot.lane.b32.xlu0 %v156, 120
  %v158 = vpop.permute.xlu0 %157
  %159 = vrot.lane.b32.xlu0 %v156, 88
  %v160 = vpop.permute.xlu0 %159
  %v162 = vsel %vm30, %v158, 0
  %v165 = vsel %vm30, %v160, 0
  %167 = vmatpush.bf16.xpose.msra.mxu0 0
  %168 = vmatpush.bf16.xpose.msra.mxu0 0
  %169 = vmatpush.bf16.xpose.msra.mxu0 0
  %170 = vmatpush.bf16.xpose.msra.mxu0 0
  %171 = vmatpush.bf16.xpose.msra.mxu0 0
  %172 = vmatpush.bf16.xpose.msra.mxu0 0
  %173 = vmatpush.bf16.xpose.msra.mxu0 0
  %174 = vmatpush.bf16.xpose.msra.mxu0 %v165
  %175 = vmatmul.bf16.gmra.mxu0 %v162
  %v176 = vpop.f32.mrf.mxu0
  %v177 = vadd.f32 0.0, %v176
  %v178 = vpop.f32.mrf.mxu0
  %179 = vdwg.mxu0
  %v181 = vunpack.c.l.b16 %v153
  %v182 = vpack.c.b16 %v181, %v181
  %183 = vrot.lane.b32.xlu0 %v182, 120
  %v184 = vpop.permute.xlu0 %183
  %185 = vrot.lane.b32.xlu0 %v182, 88
  %v186 = vpop.permute.xlu0 %185
  %v188 = vsel %vm30, %v184, 0
  %v191 = vsel %vm30, %v186, 0
  %193 = vmatpush.bf16.xpose.msra.mxu0 0
  %194 = vmatpush.bf16.xpose.msra.mxu0 0
  %195 = vmatpush.bf16.xpose.msra.mxu0 0
  %196 = vmatpush.bf16.xpose.msra.mxu0 0
  %197 = vmatpush.bf16.xpose.msra.mxu0 0
  %198 = vmatpush.bf16.xpose.msra.mxu0 0
  %199 = vmatpush.bf16.xpose.msra.mxu0 0
  %200 = vmatpush.bf16.xpose.msra.mxu0 %v191
  %201 = vmatmul.bf16.gmra.mxu0 %v188
  %v202 = vpop.f32.mrf.mxu0
  %v203 = vadd.f32 0.0, %v202
  %v204 = vpop.f32.mrf.mxu0
  %205 = vdwg.mxu0
  %v206 = vmul.f32 %v177, 0.35355338
  %v207 = vmul.f32 %v203, 0.35355338
  %v208 = vsel %vm77, %v206, -1e+09
  %v209 = vsel %vm77, %v207, -1e+09
  %v210 = vsel %vm30, %v208, -inf
  %211 = vmax.xlane.f32.xlu0 %v210
  %v212 = vpop.xlane.xlu0 %211
  %v213 = vsel %vm30, %v209, -inf
  %214 = vmax.xlane.f32.xlu0 %v213
  %v215 = vpop.xlane.xlu0 %214
  %v216 = vsub.f32 %v208, %v212
  %v217 = vsub.f32 %v209, %v215
  %v218 = vmul.f32 %v216, 1.442695
  %v219 = vpow.pop %v218
  %v220 = vmul.f32 %v217, 1.442695
  %v221 = vpow.pop %v220
  %v222 = vsel %vm30, %v219, 0.0
  %223 = vadd.xlane.f32.xlu0 %v222
  %v224 = vpop.xlane.xlu0 %223
  %v225 = vsel %vm30, %v221, 0.0
  %226 = vadd.xlane.f32.xlu0 %v225
  %v227 = vpop.xlane.xlu0 %226
  %v228 = vrcp.pop %v224
  %v229 = vrcp.pop %v227
  %v230 = vmul.f32 %v219, %v228
  %v231 = vmul.f32 %v221, %v229
  %v232 = vpack.c.bf16 %v230, %v230
  %v233 = vpack.c.bf16 %v231, %v231
  %234 = vrot.lane.b32.xlu0 %v156, 56
  %v235 = vpop.permute.xlu0 %234
  %v237 = vsel %vm30, %v232, 0
  %v240 = vsel %vm109, %v235, 0
  %242 = vmatpush.bf16.msra.mxu0 0
  %243 = vmatpush.bf16.msra.mxu0 0
  %244 = vmatpush.bf16.msra.mxu0 0
  %245 = vmatpush.bf16.msra.mxu0 0
  %246 = vmatpush.bf16.msra.mxu0 0
  %247 = vmatpush.bf16.msra.mxu0 0
  %248 = vmatpush.bf16.msra.mxu0 0
  %249 = vmatpush.bf16.msra.mxu0 %v240
  %250 = vmatmul.bf16.gmra.mxu0 %v237
  %v251 = vpop.f32.mrf.mxu0
  %v252 = vadd.f32 0.0, %v251
  %v253 = vpop.f32.mrf.mxu0
  %254 = vdwg.mxu0
  %255 = vrot.lane.b32.xlu0 %v182, 56
  %v256 = vpop.permute.xlu0 %255
  %v258 = vsel %vm30, %v233, 0
  %v261 = vsel %vm109, %v256, 0
  %263 = vmatpush.bf16.msra.mxu0 0
  %264 = vmatpush.bf16.msra.mxu0 0
  %265 = vmatpush.bf16.msra.mxu0 0
  %266 = vmatpush.bf16.msra.mxu0 0
  %267 = vmatpush.bf16.msra.mxu0 0
  %268 = vmatpush.bf16.msra.mxu0 0
  %269 = vmatpush.bf16.msra.mxu0 0
  %270 = vmatpush.bf16.msra.mxu0 %v261
  %271 = vmatmul.bf16.gmra.mxu0 %v258
  %v272 = vpop.f32.mrf.mxu0
  %v273 = vadd.f32 0.0, %v272
  %v274 = vpop.f32.mrf.mxu0
  %275 = vdwg.mxu0
  %v276 = vpack.c.bf16 %v252, %v252
  %v277 = vpack.c.bf16 %v273, %v273
  %280 = vrot.lane.b32.xlu0 %v276, 8
  %v281 = vpop.permute.xlu0 %280
  %282 = vrot.lane.b32.xlu0 %v277, 8
  %v283 = vpop.permute.xlu0 %282
  %vm286 = vcmask 126016
  %287 = vst.msk [vmem:[#allocation2] sm:$0xf] %vm286, %v281
  %288 = vst.msk [vmem:[#allocation2 + $0x4] sm:$0xf] %vm286, %v283
  %v289 = vld [vmem:[%s0] sm:$0xf]
  %v290 = vld [vmem:[%s0 + $0x4] sm:$0xf]
  %v292 = vunpack.c.l.b16 %v289
  %v293 = vpack.c.b16 %v292, %v292
  %294 = vrot.lane.b32.xlu0 %v293, 112
  %v295 = vpop.permute.xlu0 %294
  %296 = vrot.lane.b32.xlu0 %v293, 80
  %v297 = vpop.permute.xlu0 %296
  %v299 = vsel %vm30, %v295, 0
  %v302 = vsel %vm30, %v297, 0
  %304 = vmatpush.bf16.xpose.msra.mxu0 0
  %305 = vmatpush.bf16.xpose.msra.mxu0 0
  %306 = vmatpush.bf16.xpose.msra.mxu0 0
  %307 = vmatpush.bf16.xpose.msra.mxu0 0
  %308 = vmatpush.bf16.xpose.msra.mxu0 0
  %309 = vmatpush.bf16.xpose.msra.mxu0 0
  %310 = vmatpush.bf16.xpose.msra.mxu0 0
  %311 = vmatpush.bf16.xpose.msra.mxu0 %v302
  %312 = vmatmul.bf16.gmra.mxu0 %v299
  %v313 = vpop.f32.mrf.mxu0
  %v314 = vadd.f32 0.0, %v313
  %v315 = vpop.f32.mrf.mxu0
  %316 = vdwg.mxu0
  %v318 = vunpack.c.l.b16 %v290
  %v319 = vpack.c.b16 %v318, %v318
  %320 = vrot.lane.b32.xlu0 %v319, 112
  %v321 = vpop.permute.xlu0 %320
  %322 = vrot.lane.b32.xlu0 %v319, 80
  %v323 = vpop.permute.xlu0 %322
  %v325 = vsel %vm30, %v321, 0
  %v328 = vsel %vm30, %v323, 0
  %330 = vmatpush.bf16.xpose.msra.mxu0 0
  %331 = vmatpush.bf16.xpose.msra.mxu0 0
  %332 = vmatpush.bf16.xpose.msra.mxu0 0
  %333 = vmatpush.bf16.xpose.msra.mxu0 0
  %334 = vmatpush.bf16.xpose.msra.mxu0 0
  %335 = vmatpush.bf16.xpose.msra.mxu0 0
  %336 = vmatpush.bf16.xpose.msra.mxu0 0
  %337 = vmatpush.bf16.xpose.msra.mxu0 %v328
  %338 = vmatmul.bf16.gmra.mxu0 %v325
  %v339 = vpop.f32.mrf.mxu0
  %v340 = vadd.f32 0.0, %v339
  %v341 = vpop.f32.mrf.mxu0
  %342 = vdwg.mxu0
  %v343 = vmul.f32 %v314, 0.35355338
  %v344 = vmul.f32 %v340, 0.35355338
  %v345 = vsel %vm77, %v343, -1e+09
  %v346 = vsel %vm77, %v344, -1e+09
  %v347 = vsel %vm30, %v345, -inf
  %348 = vmax.xlane.f32.xlu0 %v347
  %v349 = vpop.xlane.xlu0 %348
  %v350 = vsel %vm30, %v346, -inf
  %351 = vmax.xlane.f32.xlu0 %v350
  %v352 = vpop.xlane.xlu0 %351
  %v353 = vsub.f32 %v345, %v349
  %v354 = vsub.f32 %v346, %v352
  %v355 = vmul.f32 %v353, 1.442695
  %v356 = vpow.pop %v355
  %v357 = vmul.f32 %v354, 1.442695
  %v358 = vpow.pop %v357
  %v359 = vsel %vm30, %v356, 0.0
  %360 = vadd.xlane.f32.xlu0 %v359
  %v361 = vpop.xlane.xlu0 %360
  %v362 = vsel %vm30, %v358, 0.0
  %363 = vadd.xlane.f32.xlu0 %v362
  %v364 = vpop.xlane.xlu0 %363
  %v365 = vrcp.pop %v361
  %v366 = vrcp.pop %v364
  %v367 = vmul.f32 %v356, %v365
  %v368 = vmul.f32 %v358, %v366
  %v369 = vpack.c.bf16 %v367, %v367
  %v370 = vpack.c.bf16 %v368, %v368
  %371 = vrot.lane.b32.xlu0 %v293, 48
  %v372 = vpop.permute.xlu0 %371
  %v374 = vsel %vm30, %v369, 0
  %v377 = vsel %vm109, %v372, 0
  %379 = vmatpush.bf16.msra.mxu0 0
  %380 = vmatpush.bf16.msra.mxu0 0
  %381 = vmatpush.bf16.msra.mxu0 0
  %382 = vmatpush.bf16.msra.mxu0 0
  %383 = vmatpush.bf16.msra.mxu0 0
  %384 = vmatpush.bf16.msra.mxu0 0
  %385 = vmatpush.bf16.msra.mxu0 0
  %386 = vmatpush.bf16.msra.mxu0 %v377
  %387 = vmatmul.bf16.gmra.mxu0 %v374
  %v388 = vpop.f32.mrf.mxu0
  %v389 = vadd.f32 0.0, %v388
  %v390 = vpop.f32.mrf.mxu0
  %391 = vdwg.mxu0
  %392 = vrot.lane.b32.xlu0 %v319, 48
  %v393 = vpop.permute.xlu0 %392
  %v395 = vsel %vm30, %v370, 0
  %v398 = vsel %vm109, %v393, 0
  %400 = vmatpush.bf16.msra.mxu0 0
  %401 = vmatpush.bf16.msra.mxu0 0
  %402 = vmatpush.bf16.msra.mxu0 0
  %403 = vmatpush.bf16.msra.mxu0 0
  %404 = vmatpush.bf16.msra.mxu0 0
  %405 = vmatpush.bf16.msra.mxu0 0
  %406 = vmatpush.bf16.msra.mxu0 0
  %407 = vmatpush.bf16.msra.mxu0 %v398
  %408 = vmatmul.bf16.gmra.mxu0 %v395
  %v409 = vpop.f32.mrf.mxu0
  %v410 = vadd.f32 0.0, %v409
  %v411 = vpop.f32.mrf.mxu0
  %412 = vdwg.mxu0
  %v413 = vpack.c.bf16 %v389, %v389
  %v414 = vpack.c.bf16 %v410, %v410
  %417 = vrot.lane.b32.xlu0 %v413, 16
  %v418 = vpop.permute.xlu0 %417
  %419 = vrot.lane.b32.xlu0 %v414, 16
  %v420 = vpop.permute.xlu0 %419
  %vm423 = vcmask 191616
  %424 = vst.msk [vmem:[#allocation2] sm:$0xf] %vm423, %v418
  %425 = vst.msk [vmem:[#allocation2 + $0x4] sm:$0xf] %vm423, %v420
  %v426 = vld [vmem:[%s0] sm:$0xf]
  %v427 = vld [vmem:[%s0 + $0x4] sm:$0xf]
  %v429 = vunpack.c.l.b16 %v426
  %v430 = vpack.c.b16 %v429, %v429
  %431 = vrot.lane.b32.xlu0 %v430, 104
  %v432 = vpop.permute.xlu0 %431
  %433 = vrot.lane.b32.xlu0 %v430, 72
  %v434 = vpop.permute.xlu0 %433
  %v436 = vsel %vm30, %v432, 0
  %v439 = vsel %vm30, %v434, 0
  %441 = vmatpush.bf16.xpose.msra.mxu0 0
  %442 = vmatpush.bf16.xpose.msra.mxu0 0
  %443 = vmatpush.bf16.xpose.msra.mxu0 0
  %444 = vmatpush.bf16.xpose.msra.mxu0 0
  %445 = vmatpush.bf16.xpose.msra.mxu0 0
  %446 = vmatpush.bf16.xpose.msra.mxu0 0
  %447 = vmatpush.bf16.xpose.msra.mxu0 0
  %448 = vmatpush.bf16.xpose.msra.mxu0 %v439
  %449 = vmatmul.bf16.gmra.mxu0 %v436
  %v450 = vpop.f32.mrf.mxu0
  %v451 = vadd.f32 0.0, %v450
  %v452 = vpop.f32.mrf.mxu0
  %453 = vdwg.mxu0
  %v455 = vunpack.c.l.b16 %v427
  %v456 = vpack.c.b16 %v455, %v455
  %457 = vrot.lane.b32.xlu0 %v456, 104
  %v458 = vpop.permute.xlu0 %457
  %459 = vrot.lane.b32.xlu0 %v456, 72
  %v460 = vpop.permute.xlu0 %459
  %v462 = vsel %vm30, %v458, 0
  %v465 = vsel %vm30, %v460, 0
  %467 = vmatpush.bf16.xpose.msra.mxu0 0
  %468 = vmatpush.bf16.xpose.msra.mxu0 0
  %469 = vmatpush.bf16.xpose.msra.mxu0 0
  %470 = vmatpush.bf16.xpose.msra.mxu0 0
  %471 = vmatpush.bf16.xpose.msra.mxu0 0
  %472 = vmatpush.bf16.xpose.msra.mxu0 0
  %473 = vmatpush.bf16.xpose.msra.mxu0 0
  %474 = vmatpush.bf16.xpose.msra.mxu0 %v465
  %475 = vmatmul.bf16.gmra.mxu0 %v462
  %v476 = vpop.f32.mrf.mxu0
  %v477 = vadd.f32 0.0, %v476
  %v478 = vpop.f32.mrf.mxu0
  %479 = vdwg.mxu0
  %v480 = vmul.f32 %v451, 0.35355338
  %v481 = vmul.f32 %v477, 0.35355338
  %v482 = vsel %vm77, %v480, -1e+09
  %v483 = vsel %vm77, %v481, -1e+09
  %v484 = vsel %vm30, %v482, -inf
  %485 = vmax.xlane.f32.xlu0 %v484
  %v486 = vpop.xlane.xlu0 %485
  %v487 = vsel %vm30, %v483, -inf
  %488 = vmax.xlane.f32.xlu0 %v487
  %v489 = vpop.xlane.xlu0 %488
  %v490 = vsub.f32 %v482, %v486
  %v491 = vsub.f32 %v483, %v489
  %v492 = vmul.f32 %v490, 1.442695
  %v493 = vpow.pop %v492
  %v494 = vmul.f32 %v491, 1.442695
  %v495 = vpow.pop %v494
  %v496 = vsel %vm30, %v493, 0.0
  %497 = vadd.xlane.f32.xlu0 %v496
  %v498 = vpop.xlane.xlu0 %497
  %v499 = vsel %vm30, %v495, 0.0
  %500 = vadd.xlane.f32.xlu0 %v499
  %v501 = vpop.xlane.xlu0 %500
  %v502 = vrcp.pop %v498
  %v503 = vrcp.pop %v501
  %v504 = vmul.f32 %v493, %v502
  %v505 = vmul.f32 %v495, %v503
  %v506 = vpack.c.bf16 %v504, %v504
  %v507 = vpack.c.bf16 %v505, %v505
  %508 = vrot.lane.b32.xlu0 %v430, 40
  %v509 = vpop.permute.xlu0 %508
  %v511 = vsel %vm30, %v506, 0
  %v514 = vsel %vm109, %v509, 0
  %516 = vmatpush.bf16.msra.mxu0 0
  %517 = vmatpush.bf16.msra.mxu0 0
  %518 = vmatpush.bf16.msra.mxu0 0
  %519 = vmatpush.bf16.msra.mxu0 0
  %520 = vmatpush.bf16.msra.mxu0 0
  %521 = vmatpush.bf16.msra.mxu0 0
  %522 = vmatpush.bf16.msra.mxu0 0
  %523 = vmatpush.bf16.msra.mxu0 %v514
  %524 = vmatmul.bf16.gmra.mxu0 %v511
  %v525 = vpop.f32.mrf.mxu0
  %v526 = vadd.f32 0.0, %v525
  %v527 = vpop.f32.mrf.mxu0
  %528 = vdwg.mxu0
  %529 = vrot.lane.b32.xlu0 %v456, 40
  %v530 = vpop.permute.xlu0 %529
  %v532 = vsel %vm30, %v507, 0
  %v535 = vsel %vm109, %v530, 0
  %537 = vmatpush.bf16.msra.mxu0 0
  %538 = vmatpush.bf16.msra.mxu0 0
  %539 = vmatpush.bf16.msra.mxu0 0
  %540 = vmatpush.bf16.msra.mxu0 0
  %541 = vmatpush.bf16.msra.mxu0 0
  %542 = vmatpush.bf16.msra.mxu0 0
  %543 = vmatpush.bf16.msra.mxu0 0
  %544 = vmatpush.bf16.msra.mxu0 %v535
  %545 = vmatmul.bf16.gmra.mxu0 %v532
  %v546 = vpop.f32.mrf.mxu0
  %v547 = vadd.f32 0.0, %v546
  %v548 = vpop.f32.mrf.mxu0
  %549 = vdwg.mxu0
  %v550 = vpack.c.bf16 %v526, %v526
  %v551 = vpack.c.bf16 %v547, %v547
  %554 = vrot.lane.b32.xlu0 %v550, 24
  %v555 = vpop.permute.xlu0 %554
  %556 = vrot.lane.b32.xlu0 %v551, 24
  %v557 = vpop.permute.xlu0 %556
  %vm560 = vcmask 257216
  %561 = vst.msk [vmem:[#allocation2] sm:$0xf] %vm560, %v555
  %562 = vst.msk [vmem:[#allocation2 + $0x4] sm:$0xf] %vm560, %v557
  %v563 = vld [vmem:[#allocation2] sm:$0xf]
  %v564 = vld [vmem:[#allocation2 + $0x4] sm:$0xf]
  %v565 = vld [vmem:[%s2] sm:$0xf]
  %v566 = vld [vmem:[%s2 + $0x4] sm:$0xf]
  %v567 = vld [vmem:[%s2 + $0x8] sm:$0xf]
  %v568 = vld [vmem:[%s2 + $0xc] sm:$0xf]
  %v571 = vunpack.c.l.b16 %v563
  %v572 = vunpack.c.l.b16 %v564
  %v573 = vpack.c.b16 %v572, %v571
  %v578 = vunpack.c.l.b16 %v565
  %v579 = vunpack.c.l.b16 %v566
  %v580 = vunpack.c.l.b16 %v567
  %v581 = vunpack.c.l.b16 %v568
  %v582 = vpack.c.b16 %v579, %v578
  %v583 = vpack.c.b16 %v581, %v580
  %vm586 = vcmask 261120
  %v588 = vsel %vm586, %v573, 0
  %590 = vmatpush.bf16.msra.mxu0 0
  %591 = vmatpush.bf16.msra.mxu0 0
  %592 = vmatpush.bf16.msra.mxu0 0
  %593 = vmatpush.bf16.msra.mxu0 0
  %594 = vmatpush.bf16.msra.mxu0 0
  %595 = vmatpush.bf16.msra.mxu0 0
  %596 = vmatpush.bf16.msra.mxu0 %v583
  %597 = vmatpush.bf16.msra.mxu0 %v582
  %598 = vmatmul.bf16.gmra.mxu0 %v588
  %v599 = vpop.f32.mrf.mxu0
  %v600 = vadd.f32 0.0, %v599
  %v601 = vpop.f32.mrf.mxu0
  %v602 = vadd.f32 0.0, %v601
  %603 = vdwg.mxu0
  %v604 = vld [vmem:[%s1] sm:$0xff]
  %v605 = vld [vmem:[%s1 + $0x8] sm:$0xff]
  %v606 = vadd.f32 %v604, %v600
  %v607 = vadd.f32 %v605, %v602
  %v608 = vld [vmem:[%s3] sm:$0x1]
  %v610 = vperm.slane %v608, 0
  %v612 = vadd.f32 %v606, %v610
  %v613 = vadd.f32 %v607, %v610
  %614 = vst.msk [vmem:[%s4] sm:$0xff] %vm586, %v612
  %615 = vst.msk [vmem:[%s4 + $0x8] sm:$0xff] %vm586, %v613
  // Predicated region
  $region18: #{text_encoder_forward.8} parent=0 // pred_check
    _
  $region19: #{text_encoder_forward.8} parent=0 // pred_check_branch
    %617 = sbr.rel (0) target = $region21
  $region20: #{text_encoder_forward.8} parent=0 // pred_region
    _
  $region21: #{text_encoder_forward.8} parent=0 // pred_fallthru
    _
  // Predicated region
  $region22: #{text_encoder_forward.8} parent=0 // pred_check
    _
  $region23: #{text_encoder_forward.8} parent=0 // pred_check_branch
    %619 = sbr.rel (0) target = $region25
  $region24: #{text_encoder_forward.8} parent=0 // pred_region
    _
  $region25: #{text_encoder_forward.8} parent=0 // pred_fallthru
    _

// kernel: text_encoder_forward.9
$region0: #{text_encoder_forward.9}
  #allocation0 [shape = 'u32[]', space=smem, size = 0x4, offset = 0x4, fixed_abs, tag = 'smem constant byte address 0x4 - core index']
  #allocation1 [shape = 'u32[72,128]{1,0:T(1,128)}', space=vmem, size = 0x9000, scoped, tag = 'internal scratch']
  %s0 = inlined_call_operand.vmem [shape: f32[16,32], index: 0, kind: input, shape index: {}]
  %s1 = inlined_call_operand.vmem [shape: f32[1,32], index: 1, kind: input, shape index: {}]
  %s2 = inlined_call_operand.vmem [shape: f32[1,32], index: 2, kind: input, shape index: {}]
  %s3 = inlined_call_operand.vmem [shape: bf16[32,128], index: 3, kind: input, shape index: {}]
  %s4 = inlined_call_operand.vmem [shape: f32[1,128], index: 4, kind: input, shape index: {}]
  %s5 = inlined_call_operand.vmem [shape: bf16[128,32], index: 5, kind: input, shape index: {}]
  %s6 = inlined_call_operand.vmem [shape: f32[1,32], index: 6, kind: input, shape index: {}]
  %s7 = inlined_call_operand.vmem [shape: f32[16,32], index: 7, kind: output, shape index: {}]
  %s8 = sld [smem:[#allocation0]]
  $region38: #{text_encoder_forward.9} parent=0
    _
  %s10 = ssub.s32 1, %s8
  %s11 = scalar_select 0, %s10, %s8
  // Predicated region
  $region2: #{text_encoder_forward.9} parent=0 // pred_check
    _
  $region3: #{text_encoder_forward.9} parent=0 // pred_check_branch
    %13 = sbr.rel (0) target = $region5
  $region4: #{text_encoder_forward.9} parent=0 // pred_region
    _
  $region5: #{text_encoder_forward.9} parent=0 // pred_fallthru
    _
  // Predicated region
  $region6: #{text_encoder_forward.9} parent=0 // pred_check
    _
  $region7: #{text_encoder_forward.9} parent=0 // pred_check_branch
    %15 = sbr.rel (0) target = $region9
  $region8: #{text_encoder_forward.9} parent=0 // pred_region
    _
  $region9: #{text_encoder_forward.9} parent=0 // pred_fallthru
    _
  // Predicated region
  $region10: #{text_encoder_forward.9} parent=0 // pred_check
    _
  $region11: #{text_encoder_forward.9} parent=0 // pred_check_branch
    %17 = sbr.rel (0) target = $region13
  $region12: #{text_encoder_forward.9} parent=0 // pred_region
    _
  $region13: #{text_encoder_forward.9} parent=0 // pred_fallthru
    _
  // Predicated region
  $region14: #{text_encoder_forward.9} parent=0 // pred_check
    _
  $region15: #{text_encoder_forward.9} parent=0 // pred_check_branch
    %19 = sbr.rel (0) target = $region17
  $region16: #{text_encoder_forward.9} parent=0 // pred_region
    _
  $region17: #{text_encoder_forward.9} parent=0 // pred_fallthru
    _
  // Predicated region
  $region18: #{text_encoder_forward.9} parent=0 // pred_check
    _
  $region19: #{text_encoder_forward.9} parent=0 // pred_check_branch
    %21 = sbr.rel (0) target = $region21
  $region20: #{text_encoder_forward.9} parent=0 // pred_region
    _
  $region21: #{text_encoder_forward.9} parent=0 // pred_fallthru
    _
  // Predicated region
  $region22: #{text_encoder_forward.9} parent=0 // pred_check
    _
  $region23: #{text_encoder_forward.9} parent=0 // pred_check_branch
    %23 = sbr.rel (0) target = $region25
  $region24: #{text_encoder_forward.9} parent=0 // pred_region
    _
  $region25: #{text_encoder_forward.9} parent=0 // pred_fallthru
    _
  // Predicated region
  $region26: #{text_encoder_forward.9} parent=0 // pred_check
    _
  $region27: #{text_encoder_forward.9} parent=0 // pred_check_branch
    %25 = sbr.rel (0) target = $region29
  $region28: #{text_encoder_forward.9} parent=0 // pred_region
    _
  $region29: #{text_encoder_forward.9} parent=0 // pred_fallthru
    _
  %v27 = vld [vmem:[%s0] sm:$0xff]
  %v28 = vld [vmem:[%s0 + $0x8] sm:$0xff]
  %v29 = vld [vmem:[%s1] sm:$0x1]
  %v30 = vld [vmem:[%s2] sm:$0x1]
  %vm31 = vcmask 261120
  %v32 = vsel %vm31, %v27, 0.0
  %33 = vadd.xlane.f32.xlu0 %v32
  %v34 = vpop.xlane.xlu0 %33
  %v35 = vsel %vm31, %v28, 0.0
  %36 = vadd.xlane.f32.xlu0 %v35
  %v37 = vpop.xlane.xlu0 %36
  %v38 = vrcp.pop 32.0
  %v39 = vmul.f32 32.0, %v38
  %v40 = vsub.f32 1.0, %v39
  %v41 = vmul.f32 %v38, %v40
  %v42 = vadd.f32 %v38, %v41
  %vm43 = vweird.f32 %v38
  %v44 = vsel %vm43, %v38, %v42
  %v45 = vmul.f32 %v34, %v44
  %v46 = vmul.f32 %v37, %v44
  %v47 = vsub.f32 %v27, %v45
  %v48 = vsub.f32 %v28, %v46
  %v49 = vmul.f32 %v47, %v47
  %v50 = vmul.f32 %v48, %v48
  %v51 = vsel %vm31, %v49, 0.0
  %52 = vadd.xlane.f32.xlu0 %v51
  %v53 = vpop.xlane.xlu0 %52
  %v54 = vsel %vm31, %v50, 0.0
  %55 = vadd.xlane.f32.xlu0 %v54
  %v56 = vpop.xlane.xlu0 %55
  %v57 = vmul.f32 %v53, %v44
  %v58 = vmul.f32 %v56, %v44
  %v59 = vadd.f32 %v57, 1e-05
  %v60 = vadd.f32 %v58, 1e-05
  %v61 = vrsqrt.pop %v59
  %v62 = vmul.f32 %v61, %v59
  %v63 = vmul.f32 %v62, %v61
  %v64 = vmul.f32 0.5, %v63
  %v65 = vsub.f32 1.5, %v64
  %v66 = vmul.f32 %v61, %v65
  %vm67 = vweird.f32 %v59
  %vm68 = vweird.f32 %v61
  %vm69 = vmor %vm67, %vm68
  %v70 = vsel %vm69, %v61, %v66
  %v71 = vrsqrt.pop %v60
  %v72 = vmul.f32 %v71, %v60
  %v73 = vmul.f32 %v72, %v71
  %v74 = vmul.f32 0.5, %v73
  %v75 = vsub.f32 1.5, %v74
  %v76 = vmul.f32 %v71, %v75
  %vm77 = vweird.f32 %v60
  %vm78 = vweird.f32 %v71
  %vm79 = vmor %vm77, %vm78
  %v80 = vsel %vm79, %v71, %v76
  %v81 = vmul.f32 %v47, %v70
  %v82 = vmul.f32 %v48, %v80
  %v84 = vperm.slane %v29, 0
  %v86 = vmul.f32 %v81, %v84
  %v87 = vmul.f32 %v82, %v84
  %v89 = vperm.slane %v30, 0
  %v91 = vadd.f32 %v86, %v89
  %v92 = vadd.f32 %v87, %v89
  %v93 = vpack.c.bf16 %v92, %v91
  %v94 = vld [vmem:[%s3] sm:$0xf]
  %v95 = vld [vmem:[%s3 + $0x4] sm:$0xf]
  %v96 = vld [vmem:[%s3 + $0x8] sm:$0xf]
  %v97 = vld [vmem:[%s3 + $0xc] sm:$0xf]
  %v98 = vld [vmem:[%s4] sm:$0x1]
  %v100 = vperm.slane %v98, 0
  %v106 = vunpack.c.l.b16 %v94
  %v107 = vunpack.c.l.b16 %v95
  %v108 = vunpack.c.l.b16 %v96
  %v109 = vunpack.c.l.b16 %v97
  %v110 = vpack.c.b16 %v107, %v106
  %v111 = vpack.c.b16 %v109, %v108
  %v115 = vsel %vm31, %v93, 0
  %117 = vmatpush.bf16.msra.mxu0 0
  %118 = vmatpush.bf16.msra.mxu0 0
  %119 = vmatpush.bf16.msra.mxu0 0
  %120 = vmatpush.bf16.msra.mxu0 0
  %121 = vmatpush.bf16.msra.mxu0 0
  %122 = vmatpush.bf16.msra.mxu0 0
  %123 = vmatpush.bf16.msra.mxu0 %v111
  %124 = vmatpush.bf16.msra.mxu0 %v110
  %125 = vmatmul.bf16.gmra.mxu0 %v115
  %v126 = vpop.f32.mrf.mxu0
  %v127 = vadd.f32 %v100, %v126
  %v128 = vpop.f32.mrf.mxu0
  %v129 = vadd.f32 %v100, %v128
  %130 = vdwg.mxu0
  %v131 = vmul.f32 %v127, 1.702
  %v132 = vmul.f32 %v129, 1.702
  %v133 = vxor.u32 %v131, 2147483648
  %v134 = vxor.u32 %v132, 2147483648
  %v135 = vmul.f32 %v133, 1.442695
  %v136 = vpow.pop %v135
  %v137 = vmul.f32 %v134, 1.442695
  %v138 = vpow.pop %v137
  %v139 = vadd.f32 %v136, 1.0
  %v140 = vadd.f32 %v138, 1.0
  %v141 = vrcp.pop %v139
  %v142 = vmul.f32 %v139, %v141
  %v143 = vsub.f32 1.0, %v142
  %v144 = vmul.f32 %v141, %v143
  %v145 = vadd.f32 %v141, %v144
  %vm146 = vweird.f32 %v139
  %vm147 = vweird.f32 %v141
  %vm148 = vmor %vm146, %vm147
  %v149 = vsel %vm148, %v141, %v145
  %v150 = vand.u32 2147483647, %v139
  %vm151 = vcmp.eq.f32.partialorder %v150, 8.507059e+37
  %v152 = vand.u32 %v139, 2147483648
  %v153 = vor.u32 1.1754944e-38, %v152
  %v154 = vsel %vm151, %v153, %v149
  %v155 = vmul.f32 1.0, %v154
  %v156 = vrcp.pop %v140
  %v157 = vmul.f32 %v140, %v156
  %v158 = vsub.f32 1.0, %v157
  %v159 = vmul.f32 %v156, %v158
  %v160 = vadd.f32 %v156, %v159
  %vm161 = vweird.f32 %v140
  %vm162 = vweird.f32 %v156
  %vm163 = vmor %vm161, %vm162
  %v164 = vsel %vm163, %v156, %v160
  %v165 = vand.u32 2147483647, %v140
  %vm166 = vcmp.eq.f32.partialorder %v165, 8.507059e+37
  %v167 = vand.u32 %v140, 2147483648
  %v168 = vor.u32 1.1754944e-38, %v167
  %v169 = vsel %vm166, %v168, %v164
  %v170 = vmul.f32 1.0, %v169
  %v171 = vmul.f32 %v127, %v155
  %v172 = vmul.f32 %v129, %v170
  %v173 = vpack.c.bf16 %v172, %v171
  %v174 = vld [vmem:[%s5] sm:$0xf]
  %v175 = vld [vmem:[%s5 + $0x4] sm:$0xf]
  %v176 = vld [vmem:[%s5 + $0x8] sm:$0xf]
  %v177 = vld [vmem:[%s5 + $0xc] sm:$0xf]
  %v178 = vld [vmem:[%s5 + $0x10] sm:$0xf]
  %v179 = vld [vmem:[%s5 + $0x14] sm:$0xf]
  %v180 = vld [vmem:[%s5 + $0x18] sm:$0xf]
  %v181 = vld [vmem:[%s5 + $0x1c] sm:$0xf]
  %v182 = vld [vmem:[%s5 + $0x20] sm:$0xf]
  %v183 = vld [vmem:[%s5 + $0x24] sm:$0xf]
  %v184 = vld [vmem:[%s5 + $0x28] sm:$0xf]
  %v185 = vld [vmem:[%s5 + $0x2c] sm:$0xf]
  %v186 = vld [vmem:[%s5 + $0x30] sm:$0xf]
  %v187 = vld [vmem:[%s5 + $0x34] sm:$0xf]
  %v188 = vld [vmem:[%s5 + $0x38] sm:$0xf]
  %v189 = vld [vmem:[%s5 + $0x3c] sm:$0xf]
  %v190 = vld [vmem:[%s6] sm:$0x1]
  %v192 = vperm.slane %v190, 0
  %v210 = vunpack.c.l.b16 %v174
  %v211 = vunpack.c.l.b16 %v175
  %v212 = vunpack.c.l.b16 %v176
  %v213 = vunpack.c.l.b16 %v177
  %v214 = vunpack.c.l.b16 %v178
  %v215 = vunpack.c.l.b16 %v179
  %v216 = vunpack.c.l.b16 %v180
  %v217 = vunpack.c.l.b16 %v181
  %v218 = vunpack.c.l.b16 %v182
  %v219 = vunpack.c.l.b16 %v183
  %v220 = vunpack.c.l.b16 %v184
  %v221 = vunpack.c.l.b16 %v185
  %v222 = vunpack.c.l.b16 %v186
  %v223 = vunpack.c.l.b16 %v187
  %v224 = vunpack.c.l.b16 %v188
  %v225 = vunpack.c.l.b16 %v189
  %v226 = vpack.c.b16 %v211, %v210
  %v227 = vpack.c.b16 %v213, %v212
  %v228 = vpack.c.b16 %v215, %v214
  %v229 = vpack.c.b16 %v217, %v216
  %v230 = vpack.c.b16 %v219, %v218
  %v231 = vpack.c.b16 %v221, %v220
  %v232 = vpack.c.b16 %v223, %v222
  %v233 = vpack.c.b16 %v225, %v224
  %242 = vmatpush.bf16.msra.mxu0 %v233
  %243 = vmatpush.bf16.msra.mxu0 %v232
  %244 = vmatpush.bf16.msra.mxu0 %v231
  %245 = vmatpush.bf16.msra.mxu0 %v230
  %246 = vmatpush.bf16.msra.mxu0 %v229
  %247 = vmatpush.bf16.msra.mxu0 %v228
  %248 = vmatpush.bf16.msra.mxu0 %v227
  %249 = vmatpush.bf16.msra.mxu0 %v226
  %250 = vmatmul.bf16.gmra.mxu0 %v173
  %v251 = vpop.f32.mrf.mxu0
  %v252 = vadd.f32 %v192, %v251
  %v253 = vpop.f32.mrf.mxu0
  %v254 = vadd.f32 %v192, %v253
  %255 = vdwg.mxu0
  %v256 = vadd.f32 %v27, %v252
  %v257 = vadd.f32 %v28, %v254
  %258 = vst.msk [vmem:[%s7] sm:$0xff] %vm31, %v256
  %259 = vst.msk [vmem:[%s7 + $0x8] sm:$0xff] %vm31, %v257
  // Predicated region
  $region30: #{text_encoder_forward.9} parent=0 // pred_check
    _
  $region31: #{text_encoder_forward.9} parent=0 // pred_check_branch
    %261 = sbr.rel (0) target = $region33
  $region32: #{text_encoder_forward.9} parent=0 // pred_region
    _
  $region33: #{text_encoder_forward.9} parent=0 // pred_fallthru
    _
  // Predicated region
  $region34: #{text_encoder_forward.9} parent=0 // pred_check
    _
  $region35: #{text_encoder_forward.9} parent=0 // pred_check_branch
    %263 = sbr.rel (0) target = $region37
  $region36: #{text_encoder_forward.9} parent=0 // pred_region
    _
  $region37: #{text_encoder_forward.9} parent=0 // pred_fallthru
    _

// kernel: text_encoder_forward.13
$region0: #{text_encoder_forward.13}
  #allocation0 [shape = 'u32[]', space=smem, size = 0x4, offset = 0x4, fixed_abs, tag = 'smem constant byte address 0x4 - core index']
  #allocation1 [shape = 'u32[72,128]{1,0:T(1,128)}', space=vmem, size = 0x9000, scoped, tag = 'internal scratch']
  %s0 = inlined_call_operand.vmem [shape: f32[8,32], index: 0, kind: input, shape index: {}]
  %s1 = inlined_call_operand.vmem [shape: f32[1,32], index: 1, kind: input, shape index: {}]
  %s2 = inlined_call_operand.vmem [shape: f32[1,32], index: 2, kind: input, shape index: {}]
  %s3 = inlined_call_operand.vmem [shape: bf16[32,32], index: 3, kind: input, shape index: {}]
  %s4 = inlined_call_operand.vmem [shape: f32[8,32], index: 4, kind: output, shape index: {}]
  %s5 = sld [smem:[#allocation0]]
  $region26: #{text_encoder_forward.13} parent=0
    _
  %s7 = ssub.s32 1, %s5
  %s8 = scalar_select 0, %s7, %s5
  // Predicated region
  $region2: #{text_encoder_forward.13} parent=0 // pred_check
    _
  $region3: #{text_encoder_forward.13} parent=0 // pred_check_branch
    %10 = sbr.rel (0) target = $region5
  $region4: #{text_encoder_forward.13} parent=0 // pred_region
    _
  $region5: #{text_encoder_forward.13} parent=0 // pred_fallthru
    _
  // Predicated region
  $region6: #{text_encoder_forward.13} parent=0 // pred_check
    _
  $region7: #{text_encoder_forward.13} parent=0 // pred_check_branch
    %12 = sbr.rel (0) target = $region9
  $region8: #{text_encoder_forward.13} parent=0 // pred_region
    _
  $region9: #{text_encoder_forward.13} parent=0 // pred_fallthru
    _
  // Predicated region
  $region10: #{text_encoder_forward.13} parent=0 // pred_check
    _
  $region11: #{text_encoder_forward.13} parent=0 // pred_check_branch
    %14 = sbr.rel (0) target = $region13
  $region12: #{text_encoder_forward.13} parent=0 // pred_region
    _
  $region13: #{text_encoder_forward.13} parent=0 // pred_fallthru
    _
  // Predicated region
  $region14: #{text_encoder_forward.13} parent=0 // pred_check
    _
  $region15: #{text_encoder_forward.13} parent=0 // pred_check_branch
    %16 = sbr.rel (0) target = $region17
  $region16: #{text_encoder_forward.13} parent=0 // pred_region
    _
  $region17: #{text_encoder_forward.13} parent=0 // pred_fallthru
    _
  %v18 = vld [vmem:[%s0] sm:$0xff]
  %v19 = vld [vmem:[%s1] sm:$0x1]
  %v20 = vld [vmem:[%s2] sm:$0x1]
  %vm21 = vcmask 261120
  %v22 = vsel %vm21, %v18, 0.0
  %23 = vadd.xlane.f32.xlu0 %v22
  %v24 = vpop.xlane.xlu0 %23
  %v25 = vrcp.pop 32.0
  %v26 = vmul.f32 32.0, %v25
  %v27 = vsub.f32 1.0, %v26
  %v28 = vmul.f32 %v25, %v27
  %v29 = vadd.f32 %v25, %v28
  %vm30 = vweird.f32 %v25
  %v31 = vsel %vm30, %v25, %v29
  %v32 = vmul.f32 %v24, %v31
  %v33 = vsub.f32 %v18, %v32
  %v34 = vmul.f32 %v33, %v33
  %v35 = vsel %vm21, %v34, 0.0
  %36 = vadd.xlane.f32.xlu0 %v35
  %v37 = vpop.xlane.xlu0 %36
  %v38 = vmul.f32 %v37, %v31
  %v39 = vadd.f32 %v38, 1e-05
  %v40 = vrsqrt.pop %v39
  %v41 = vmul.f32 %v40, %v39
  %v42 = vmul.f32 %v41, %v40
  %v43 = vmul.f32 0.5, %v42
  %v44 = vsub.f32 1.5, %v43
  %v45 = vmul.f32 %v40, %v44
  %vm46 = vweird.f32 %v39
  %vm47 = vweird.f32 %v40
  %vm48 = vmor %vm46, %vm47
  %v49 = vsel %vm48, %v40, %v45
  %v50 = vmul.f32 %v33, %v49
  %v52 = vperm.slane %v19, 0
  %v54 = vmul.f32 %v50, %v52
  %v56 = vperm.slane %v20, 0
  %v58 = vadd.f32 %v54, %v56
  %v59 = vpack.c.bf16 %v58, %v58
  %v60 = vld [vmem:[%s3] sm:$0xf]
  %v61 = vld [vmem:[%s3 + $0x4] sm:$0xf]
  %v62 = vld [vmem:[%s3 + $0x8] sm:$0xf]
  %v63 = vld [vmem:[%s3 + $0xc] sm:$0xf]
  %v68 = vunpack.c.l.b16 %v60
  %v69 = vunpack.c.l.b16 %v61
  %v70 = vunpack.c.l.b16 %v62
  %v71 = vunpack.c.l.b16 %v63
  %v72 = vpack.c.b16 %v69, %v68
  %v73 = vpack.c.b16 %v71, %v70
  %v77 = vsel %vm21, %v59, 0
  %79 = vmatpush.bf16.msra.mxu0 0
  %80 = vmatpush.bf16.msra.mxu0 0
  %81 = vmatpush.bf16.msra.mxu0 0
  %82 = vmatpush.bf16.msra.mxu0 0
  %83 = vmatpush.bf16.msra.mxu0 0
  %84 = vmatpush.bf16.msra.mxu0 0
  %85 = vmatpush.bf16.msra.mxu0 %v73
  %86 = vmatpush.bf16.msra.mxu0 %v72
  %87 = vmatmul.bf16.gmra.mxu0 %v77
  %v88 = vpop.f32.mrf.mxu0
  %v89 = vadd.f32 0.0, %v88
  %v90 = vpop.f32.mrf.mxu0
  %91 = vdwg.mxu0
  %92 = vst.msk [vmem:[%s4] sm:$0xff] %vm21, %v89
  // Predicated region
  $region18: #{text_encoder_forward.13} parent=0 // pred_check
    _
  $region19: #{text_encoder_forward.13} parent=0 // pred_check_branch
    %94 = sbr.rel (0) target = $region21
  $region20: #{text_encoder_forward.13} parent=0 // pred_region
    _
  $region21: #{text_encoder_forward.13} parent=0 // pred_fallthru
    _
  // Predicated region
  $region22: #{text_encoder_forward.13} parent=0 // pred_check
    _
  $region23: #{text_encoder_forward.13} parent=0 // pred_check_branch
    %96 = sbr.rel (0) target = $region25
  $region24: #{text_encoder_forward.13} parent=0 // pred_region
    _
  $region25: #{text_encoder_forward.13} parent=0 // pred_fallthru
    _

</llo_original>
